<compile_context>
chip_gen: v7x
topology: tpu7x:2x2x1
jax: 0.10.0
libtpu: 0.0.40
codegen_flags: <defaults>
</compile_context>

<pallas_src>
import functools

import jax
import jax.numpy as jnp
from jax.experimental import pallas as pl
from jax.experimental.pallas import tpu as pltpu


# ----------------------------------------------------------------------------
# Fused kernel: all transformer blocks (grid axis 1 = depth) + pooling head.
# ----------------------------------------------------------------------------
def _fused_kernel(x_ref,
                  wq_ref, wk_ref, wv_ref, wu_ref, bu_ref,
                  g1_ref, be1_ref,
                  w1_ref, bf1_ref, w2_ref, bf2_ref,
                  g2_ref, be2_ref,
                  wp_ref, bp_ref,
                  o_ref,
                  act_ref,
                  *, heads, bb, seq, emb, num_labels, ffn_chunk, compute_dtype):
    d = pl.program_id(1)
    n_depth = pl.num_programs(1)
    cd = compute_dtype
    rows = bb * seq

    # Load the batch tile's activations into resident VMEM scratch at layer 0.
    @pl.when(d == 0)
    def _():
        act_ref[...] = x_ref[...].reshape(rows, emb).astype(jnp.float32)

    x2 = act_ref[...]                                   # (rows, E) f32
    xc = x2.astype(cd)

    # ---- self-attention --------------------------------------------------
    # Fused QKV: one (rows, E) x (E, H*E) matmul each (qk scale folded in wq).
    q = jnp.dot(xc, wq_ref[...], preferred_element_type=jnp.float32)
    k = jnp.dot(xc, wk_ref[...], preferred_element_type=jnp.float32)
    v = jnp.dot(xc, wv_ref[...], preferred_element_type=jnp.float32)

    def split_heads(m):
        # (rows, H*E) with lanes ordered (h, e)  ->  (H*bb, T, E), batch=(h,b)
        parts = [m[:, h * emb:(h + 1) * emb] for h in range(heads)]
        cat = parts[0] if heads == 1 else jnp.concatenate(parts, axis=0)
        return cat.reshape(heads * bb, seq, emb)

    qh = split_heads(q).astype(cd)
    kh = split_heads(k).astype(cd)
    vh = split_heads(v).astype(cd)

    # Scores / softmax / weighted sum batched over ALL (head, batch) pairs.
    s = jnp.einsum('bqd,bkd->bqk', qh, kh,
                   preferred_element_type=jnp.float32)          # (H*bb, T, T)
    s = s - jnp.max(s, axis=-1, keepdims=True)
    p = jnp.exp(s)
    p = p / jnp.sum(p, axis=-1, keepdims=True)                  # exact divide
    o = jnp.einsum('bqk,bkd->bqd', p.astype(cd), vh,
                   preferred_element_type=jnp.float32)          # (H*bb, T, E)

    # Merge heads back onto the lane axis: (H*bb, T, E) -> (rows, H*E).
    o = o.reshape(heads, rows, emb)
    parts = [o[h] for h in range(heads)]
    o_cat = parts[0] if heads == 1 else jnp.concatenate(parts, axis=-1)

    # Single concat-heads unify matmul.
    attended = jnp.dot(o_cat.astype(cd), wu_ref[...],
                       preferred_element_type=jnp.float32) + bu_ref[...]

    # ---- residual + LayerNorm 1 -------------------------------------------
    y = attended + x2
    mu = jnp.mean(y, axis=-1, keepdims=True)
    var = jnp.mean((y - mu) ** 2, axis=-1, keepdims=True)
    y = (y - mu) * jax.lax.rsqrt(var + 1e-5) * g1_ref[...] + be1_ref[...]

    # TODO(synk): nn.Dropout layers are identity here (inference mode), no RNG.

    # ---- feed-forward, chunked over the hidden (4E) dim --------------------
    fdim = w1_ref.shape[-1]
    yc = y.astype(cd)
    ff = jnp.zeros((rows, emb), jnp.float32)
    for c in range(fdim // ffn_chunk):                   # static chunk loop
        lo = c * ffn_chunk
        h1 = jnp.dot(yc, w1_ref[:, lo:lo + ffn_chunk],
                     preferred_element_type=jnp.float32)
        h1 = jnp.maximum(h1 + bf1_ref[:, lo:lo + ffn_chunk], 0.0)
        ff = ff + jnp.dot(h1.astype(cd), w2_ref[lo:lo + ffn_chunk, :],
                          preferred_element_type=jnp.float32)
    ff = ff + bf2_ref[...]

    # ---- residual + LayerNorm 2 --------------------------------------------
    z = ff + y
    mu2 = jnp.mean(z, axis=-1, keepdims=True)
    var2 = jnp.mean((z - mu2) ** 2, axis=-1, keepdims=True)
    z = (z - mu2) * jax.lax.rsqrt(var2 + 1e-5) * g2_ref[...] + be2_ref[...]

    act_ref[...] = z

    # ---- classifier head (last layer): max-pool + linear + log_softmax -----
    @pl.when(d == n_depth - 1)
    def _():
        pooled = jnp.max(z.reshape(bb, seq, emb), axis=1)        # (bb, E)
        logits = jnp.dot(pooled.astype(cd), wp_ref[...],
                         preferred_element_type=jnp.float32) + bp_ref[...]
        lp = logits.shape[-1]
        if lp > num_labels:      # static: mask the 128-lane padding lanes
            lane = jax.lax.broadcasted_iota(jnp.int32, (bb, lp), 1)
            logits = jnp.where(lane < num_labels, logits, -jnp.inf)
        m = jnp.max(logits, axis=-1, keepdims=True)
        sh = logits - m
        lse = jnp.log(jnp.sum(jnp.exp(sh), axis=-1, keepdims=True))
        o_ref[...] = (sh - lse)[None].astype(o_ref.dtype)


def _pick_vmem_limit():
    """~3/4 of physical VMEM, capped at 100 MiB (≈96 MiB v5e/v6e, ≈48 MiB v7x)."""
    cap = 64 * 1024 * 1024                      # conservative fallback
    try:
        info = pltpu.get_tpu_info()
        cap = int(getattr(info, "vmem_capacity_bytes", cap) or cap)
    except Exception:
        pass
    return int(min(cap * 3 // 4, 100 * 1024 * 1024))


def fused_transformer(x, params, *, heads, compute_dtype=jnp.float32,
                      batch_tile=None, ffn_chunk=512):
    """x: (B, T, E) f32 -> (B, num_labels) f32 log-probs."""
    B, T, E = x.shape
    blocks = params["blocks"]
    depth = len(blocks)
    L = params["wp"].shape[1]
    Lp = max(128, ((L + 127) // 128) * 128)     # lane-dense classifier output

    scale = float(E) ** -0.5
    wdt = compute_dtype                         # matmul-operand dtype

    def stk(key, fn=lambda a: a, dt=jnp.float32):
        return jnp.stack([fn(b[key]) for b in blocks], axis=0).astype(dt)

    # Matmul weights in compute dtype; biases / LayerNorm params stay f32.
    wq = stk("wq", lambda w: w * scale, wdt)    # (D, E, H*E); qk scale folded
    wk = stk("wk", dt=wdt)
    wv = stk("wv", dt=wdt)
    wu = stk("wu", dt=wdt)                      # (D, H*E, E)
    bu, g1, be1 = stk("bu"), stk("g1"), stk("be1")
    w1, bf1 = stk("w1", dt=wdt), stk("bf1")
    w2, bf2 = stk("w2", dt=wdt), stk("bf2")
    g2, be2 = stk("g2"), stk("be2")

    wp = params["wp"].astype(wdt)
    bp = params["bp"].astype(jnp.float32)
    if Lp != L:
        wp = jnp.pad(wp, ((0, 0), (0, Lp - L)))
        bp = jnp.pad(bp, ((0, 0), (0, Lp - L)))

    # Batch tiling: prefer >=2 tiles so the "parallel" batch axis can shard
    # across v7x's 2 TensorCores; on single-TC chips raise batch_tile so rows
    # per program are as large as VMEM allows.
    if batch_tile is None:
        bb = B // 2 if (B % 2 == 0 and B >= 2) else B
    else:
        bb = batch_tile
    assert B % bb == 0, "batch must be divisible by the batch tile"
    nb = B // bb

    fdim = w1.shape[-1]
    ffn_chunk = min(ffn_chunk, fdim)
    if fdim % ffn_chunk != 0:
        ffn_chunk = fdim

    def wspec(arr):
        # per-layer weight tile: leading depth dim indexed by d and squeezed
        nd = arr.ndim - 1
        return pl.BlockSpec((pl.Squeezed(),) + tuple(arr.shape[1:]),
                            lambda b, d, _nd=nd: (d,) + (0,) * _nd)

    def cspec(arr):
        # depth-independent (classifier) weights
        nd = arr.ndim
        return pl.BlockSpec(tuple(arr.shape), lambda b, d, _nd=nd: (0,) * _nd)

    weight_arrays = (wq, wk, wv, wu, bu, g1, be1, w1, bf1, w2, bf2, g2, be2)

    in_specs = [pl.BlockSpec((bb, T, E), lambda b, d: (b, 0, 0))]
    in_specs += [wspec(w) for w in weight_arrays]
    in_specs += [cspec(wp), cspec(bp)]

    kernel = functools.partial(
        _fused_kernel, heads=heads, bb=bb, seq=T, emb=E, num_labels=L,
        ffn_chunk=ffn_chunk, compute_dtype=compute_dtype)

    out = pl.pallas_call(
        kernel,
        out_shape=jax.ShapeDtypeStruct((nb, bb, Lp), x.dtype),
        grid_spec=pltpu.PrefetchScalarGridSpec(
            num_scalar_prefetch=0,
            grid=(nb, depth),
            in_specs=in_specs,
            out_specs=pl.BlockSpec((1, bb, Lp), lambda b, d: (b, 0, 0)),
            scratch_shapes=[pltpu.VMEM((bb * T, E), jnp.float32)],
        ),
        compiler_params=pltpu.CompilerParams(
            dimension_semantics=("parallel", "arbitrary"),
            vmem_limit_bytes=_pick_vmem_limit()),
    )(x, *weight_arrays, wp, bp)

    return out.reshape(B, Lp)[:, :L]


# ----------------------------------------------------------------------------
# Parameter construction (deterministic, synthetic).
# Linear weights stored (in, out) so kernels compute y = x @ W + b.
# ----------------------------------------------------------------------------
def init_params(key, *, embedding_dim, seq_length, num_heads, num_tokens,
                depth, num_labels, fc_mult=4):
    E, H = embedding_dim, num_heads
    keys = jax.random.split(key, 4 + depth)

    def uniform(k, shape, fan_in):
        bound = 1.0 / jnp.sqrt(fan_in)
        return jax.random.uniform(k, shape, jnp.float32, -bound, bound)

    params = {
        "token_emb": jax.random.normal(keys[0], (num_tokens, E), jnp.float32),
        "pos_emb": jax.random.normal(keys[1], (seq_length, E), jnp.float32),
        "wp": uniform(keys[2], (E, num_labels), E),
        "bp": uniform(keys[3], (1, num_labels), E),
        "blocks": [],
    }
    for d in range(depth):
        bk = jax.random.split(keys[4 + d], 10)
        blk = {
            "wq": uniform(bk[0], (E, E * H), E),
            "wk": uniform(bk[1], (E, E * H), E),
            "wv": uniform(bk[2], (E, E * H), E),
            "wu": uniform(bk[3], (H * E, E), H * E),
            "bu": uniform(bk[4], (1, E), H * E),
            "g1": jnp.ones((1, E), jnp.float32),
            "be1": jnp.zeros((1, E), jnp.float32),
            "w1": uniform(bk[5], (E, fc_mult * E), E),
            "bf1": uniform(bk[6], (1, fc_mult * E), E),
            "w2": uniform(bk[7], (fc_mult * E, E), fc_mult * E),
            "bf2": uniform(bk[8], (1, E), fc_mult * E),
            "g2": jnp.ones((1, E), jnp.float32),
            "be2": jnp.zeros((1, E), jnp.float32),
        }
        params["blocks"].append(blk)
    return params


def transformer_forward(token_ids, params, *, num_heads,
                        compute_dtype=jnp.float32):
    # Embedding lookups (glue, plain JAX).
    tokens = params["token_emb"][token_ids]                       # (B, T, E)
    T = token_ids.shape[1]
    positions = params["pos_emb"][jnp.arange(T)][None, :, :]      # (1, T, E)
    x = tokens + positions
    # output dropout: identity (inference)
    return fused_transformer(x, params, heads=num_heads,
                             compute_dtype=compute_dtype)          # (B, L)


# ----------------------------------------------------------------------------
# Pure-JAX reference (for sanity checking the Pallas kernel).
# ----------------------------------------------------------------------------
def reference_forward(token_ids, params, *, num_heads):
    tokens = params["token_emb"][token_ids]
    T = token_ids.shape[1]
    x = tokens + params["pos_emb"][jnp.arange(T)][None, :, :]
    E = x.shape[-1]
    for blk in params["blocks"]:
        q = (x @ blk["wq"]) / (E ** 0.25)
        k = (x @ blk["wk"]) / (E ** 0.25)
        v = x @ blk["wv"]
        B, T_, _ = x.shape
        q = q.reshape(B, T_, num_heads, E).transpose(0, 2, 1, 3)
        k = k.reshape(B, T_, num_heads, E).transpose(0, 2, 1, 3)
        v = v.reshape(B, T_, num_heads, E).transpose(0, 2, 1, 3)
        s = jax.nn.softmax(q @ k.transpose(0, 1, 3, 2), axis=-1)
        o = (s @ v).transpose(0, 2, 1, 3).reshape(B, T_, num_heads * E)
        attended = o @ blk["wu"] + blk["bu"]
        y = attended + x
        y = (y - y.mean(-1, keepdims=True)) * jax.lax.rsqrt(
            y.var(-1, keepdims=True) + 1e-5) * blk["g1"] + blk["be1"]
        ff = jnp.maximum(y @ blk["w1"] + blk["bf1"], 0.0) @ blk["w2"] + blk["bf2"]
        z = ff + y
        x = (z - z.mean(-1, keepdims=True)) * jax.lax.rsqrt(
            z.var(-1, keepdims=True) + 1e-5) * blk["g2"] + blk["be2"]
    pooled = x.max(axis=1)
    logits = pooled @ params["wp"] + params["bp"]
    return jax.nn.log_softmax(logits, axis=-1)


if __name__ == "__main__":
    # Small shapes consistent with the module's forward.
    B, T, E, H = 2, 8, 32, 2
    NUM_TOKENS, DEPTH, NUM_LABELS = 100, 2, 4

    key = jax.random.PRNGKey(0)
    pkey, xkey = jax.random.split(key)
    params = init_params(pkey, embedding_dim=E, seq_length=T, num_heads=H,
                         num_tokens=NUM_TOKENS, depth=DEPTH,
                         num_labels=NUM_LABELS)
    token_ids = jax.random.randint(xkey, (B, T), 0, NUM_TOKENS, dtype=jnp.int32)

    # f32-operand path: tight check against the pure-JAX reference.
    out = transformer_forward(token_ids, params, num_heads=H)
    out = jax.block_until_ready(out)
    ref = reference_forward(token_ids, params, num_heads=H)
    assert out.shape == (B, NUM_LABELS)
    assert jnp.all(jnp.isfinite(out))
    assert jnp.allclose(out, ref, rtol=1e-3, atol=1e-3), (out, ref)

    # bf16-operand path (the peak-MXU path on v6e/v7x): loose sanity check.
    out_bf16 = transformer_forward(token_ids, params, num_heads=H,
                                   compute_dtype=jnp.bfloat16)
    out_bf16 = jax.block_until_ready(out_bf16)
    assert out_bf16.shape == (B, NUM_LABELS)
    assert jnp.all(jnp.isfinite(out_bf16))
    assert jnp.allclose(out_bf16, ref, rtol=0.1, atol=0.2), (out_bf16, ref)

    print("KERNEL_OK")
</pallas_src>

<mosaic_0001>
module attributes {stable_mosaic.version = 11 : i64} {
  func.func @_fused_kernel(%arg0: i32, %arg1: i32, %arg2: memref<1x8x32xf32, #tpu.memory_space<vmem>>, %arg3: memref<1x32x64xf32, #tpu.memory_space<vmem>>, %arg4: memref<1x32x64xf32, #tpu.memory_space<vmem>>, %arg5: memref<1x32x64xf32, #tpu.memory_space<vmem>>, %arg6: memref<1x64x32xf32, #tpu.memory_space<vmem>>, %arg7: memref<1x1x32xf32, #tpu.memory_space<vmem>>, %arg8: memref<1x1x32xf32, #tpu.memory_space<vmem>>, %arg9: memref<1x1x32xf32, #tpu.memory_space<vmem>>, %arg10: memref<1x32x128xf32, #tpu.memory_space<vmem>>, %arg11: memref<1x1x128xf32, #tpu.memory_space<vmem>>, %arg12: memref<1x128x32xf32, #tpu.memory_space<vmem>>, %arg13: memref<1x1x32xf32, #tpu.memory_space<vmem>>, %arg14: memref<1x1x32xf32, #tpu.memory_space<vmem>>, %arg15: memref<1x1x32xf32, #tpu.memory_space<vmem>>, %arg16: memref<32x128xf32, #tpu.memory_space<vmem>>, %arg17: memref<1x128xf32, #tpu.memory_space<vmem>>, %arg18: memref<1x1x128xf32, #tpu.memory_space<vmem>>, %arg19: memref<8x32xf32, #tpu.memory_space<vmem>>) attributes {dimension_semantics = [#tpu.dimension_semantics<parallel>, #tpu.dimension_semantics<arbitrary>], iteration_bounds = array<i64: 2, 2>, scalar_prefetch = 0 : i64, scratch_operands = 1 : i64, tpu.core_type = #tpu.core_type<tc>, window_params = [{transform_indices = @transform_0, window_bounds = array<i64: 1, 8, 32>}, {transform_indices = @transform_1, window_bounds = array<i64: 1, 32, 64>}, {transform_indices = @transform_2, window_bounds = array<i64: 1, 32, 64>}, {transform_indices = @transform_3, window_bounds = array<i64: 1, 32, 64>}, {transform_indices = @transform_4, window_bounds = array<i64: 1, 64, 32>}, {transform_indices = @transform_5, window_bounds = array<i64: 1, 1, 32>}, {transform_indices = @transform_6, window_bounds = array<i64: 1, 1, 32>}, {transform_indices = @transform_7, window_bounds = array<i64: 1, 1, 32>}, {transform_indices = @transform_8, window_bounds = array<i64: 1, 32, 128>}, {transform_indices = @transform_9, window_bounds = array<i64: 1, 1, 128>}, {transform_indices = @transform_10, window_bounds = array<i64: 1, 128, 32>}, {transform_indices = @transform_11, window_bounds = array<i64: 1, 1, 32>}, {transform_indices = @transform_12, window_bounds = array<i64: 1, 1, 32>}, {transform_indices = @transform_13, window_bounds = array<i64: 1, 1, 32>}, {pipeline_mode = #tpu.pipeline_mode<synchronous>, transform_indices = @transform_14, window_bounds = array<i64: 32, 128>}, {pipeline_mode = #tpu.pipeline_mode<synchronous>, transform_indices = @transform_15, window_bounds = array<i64: 1, 128>}, {transform_indices = @transform_16, window_bounds = array<i64: 1, 1, 128>}]} {
    %c0_i32 = arith.constant 0 : i32
    %0 = arith.cmpi eq, %arg1, %c0_i32 : i32
    %1 = arith.extui %0 : i1 to i32
    %c0_i32_0 = arith.constant 0 : i32
    %2 = arith.cmpi ne, %1, %c0_i32_0 : i32
    scf.if %2 {
      %c0_65 = arith.constant 0 : index
      %c0_66 = arith.constant 0 : index
      %c0_67 = arith.constant 0 : index
      %124 = vector.load %arg2[%c0_65, %c0_66, %c0_67] : memref<1x8x32xf32, #tpu.memory_space<vmem>>, vector<1x8x32xf32>
      %125 = vector.shape_cast %124 : vector<1x8x32xf32> to vector<8x32xf32>
      %c0_68 = arith.constant 0 : index
      %c0_69 = arith.constant 0 : index
      %126 = vector.load %arg19[%c0_68, %c0_69] : memref<8x32xf32, #tpu.memory_space<vmem>>, vector<8x32xf32>
      tpu.vector_store %arg19[%c0_68, %c0_69], %125 {strides = array<i32>} : memref<8x32xf32, #tpu.memory_space<vmem>>, vector<8x32xf32>,
    } else {
    }
    %c0 = arith.constant 0 : index
    %c0_1 = arith.constant 0 : index
    %3 = vector.load %arg19[%c0, %c0_1] : memref<8x32xf32, #tpu.memory_space<vmem>>, vector<8x32xf32>
    %c0_2 = arith.constant 0 : index
    %c0_3 = arith.constant 0 : index
    %c0_4 = arith.constant 0 : index
    %4 = vector.load %arg3[%c0_2, %c0_3, %c0_4] : memref<1x32x64xf32, #tpu.memory_space<vmem>>, vector<1x32x64xf32>
    %5 = vector.shape_cast %4 : vector<1x32x64xf32> to vector<32x64xf32>
    %cst = arith.constant dense<0.000000e+00> : vector<8x64xf32>
    %6 = tpu.matmul %3, %5, %cst {dimension_numbers = #tpu.dot_dimension_numbers<[1], [0], [0], [1], [0, 0, 1, 1], [], []>} : vector<8x32xf32>, vector<32x64xf32>, vector<8x64xf32> -> vector<8x64xf32>
    %c0_5 = arith.constant 0 : index
    %c0_6 = arith.constant 0 : index
    %c0_7 = arith.constant 0 : index
    %7 = vector.load %arg4[%c0_5, %c0_6, %c0_7] : memref<1x32x64xf32, #tpu.memory_space<vmem>>, vector<1x32x64xf32>
    %8 = vector.shape_cast %7 : vector<1x32x64xf32> to vector<32x64xf32>
    %cst_8 = arith.constant dense<0.000000e+00> : vector<8x64xf32>
    %9 = tpu.matmul %3, %8, %cst_8 {dimension_numbers = #tpu.dot_dimension_numbers<[1], [0], [0], [1], [0, 0, 1, 1], [], []>} : vector<8x32xf32>, vector<32x64xf32>, vector<8x64xf32> -> vector<8x64xf32>
    %c0_9 = arith.constant 0 : index
    %c0_10 = arith.constant 0 : index
    %c0_11 = arith.constant 0 : index
    %10 = vector.load %arg5[%c0_9, %c0_10, %c0_11] : memref<1x32x64xf32, #tpu.memory_space<vmem>>, vector<1x32x64xf32>
    %11 = vector.shape_cast %10 : vector<1x32x64xf32> to vector<32x64xf32>
    %cst_12 = arith.constant dense<0.000000e+00> : vector<8x64xf32>
    %12 = tpu.matmul %3, %11, %cst_12 {dimension_numbers = #tpu.dot_dimension_numbers<[1], [0], [0], [1], [0, 0, 1, 1], [], []>} : vector<8x32xf32>, vector<32x64xf32>, vector<8x64xf32> -> vector<8x64xf32>
    %13 = vector.extract_strided_slice %6 {offsets = [0, 0], sizes = [8, 32], strides = [1, 1]} : vector<8x64xf32> to vector<8x32xf32>
    %14 = vector.extract_strided_slice %6 {offsets = [0, 32], sizes = [8, 32], strides = [1, 1]} : vector<8x64xf32> to vector<8x32xf32>
    %15 = tpu.concatenate %13, %14 in 0 : vector<8x32xf32>, vector<8x32xf32> -> vector<16x32xf32>
    %16 = vector.shape_cast %15 : vector<16x32xf32> to vector<2x8x32xf32>
    %17 = vector.extract_strided_slice %9 {offsets = [0, 0], sizes = [8, 32], strides = [1, 1]} : vector<8x64xf32> to vector<8x32xf32>
    %18 = vector.extract_strided_slice %9 {offsets = [0, 32], sizes = [8, 32], strides = [1, 1]} : vector<8x64xf32> to vector<8x32xf32>
    %19 = tpu.concatenate %17, %18 in 0 : vector<8x32xf32>, vector<8x32xf32> -> vector<16x32xf32>
    %20 = vector.shape_cast %19 : vector<16x32xf32> to vector<2x8x32xf32>
    %21 = vector.extract_strided_slice %12 {offsets = [0, 0], sizes = [8, 32], strides = [1, 1]} : vector<8x64xf32> to vector<8x32xf32>
    %22 = vector.extract_strided_slice %12 {offsets = [0, 32], sizes = [8, 32], strides = [1, 1]} : vector<8x64xf32> to vector<8x32xf32>
    %23 = tpu.concatenate %21, %22 in 0 : vector<8x32xf32>, vector<8x32xf32> -> vector<16x32xf32>
    %24 = vector.shape_cast %23 : vector<16x32xf32> to vector<2x8x32xf32>
    "tpu.trace_start"() <{level = 10 : i32, message = "bqd,bkd->bqk"}> : () -> ()
    %cst_13 = arith.constant dense<0.000000e+00> : vector<2x8x8xf32>
    %25 = tpu.matmul %16, %20, %cst_13 {dimension_numbers = #tpu.dot_dimension_numbers<[2], [2], [1], [1], [0, 0, 0, 1, 1, 1], [0], [0]>} : vector<2x8x32xf32>, vector<2x8x32xf32>, vector<2x8x8xf32> -> vector<2x8x8xf32>
    "tpu.trace_stop"() : () -> ()
    %cst_14 = arith.constant dense<0xFF800000> : vector<2x8xf32>
    %26 = vector.multi_reduction <maximumf>, %25, %cst_14 [2] : vector<2x8x8xf32> to vector<2x8xf32>
    %27 = vector.shape_cast %26 : vector<2x8xf32> to vector<2x8x1xf32>
    %28 = vector.broadcast %27 : vector<2x8x1xf32> to vector<2x8x8xf32>
    %29 = arith.subf %25, %28 : vector<2x8x8xf32>
    %30 = math.exp %29 : vector<2x8x8xf32>
    %cst_15 = arith.constant dense<0.000000e+00> : vector<2x8xf32>
    %31 = vector.multi_reduction <add>, %30, %cst_15 [2] : vector<2x8x8xf32> to vector<2x8xf32>
    %32 = vector.shape_cast %31 : vector<2x8xf32> to vector<2x8x1xf32>
    %33 = vector.broadcast %32 : vector<2x8x1xf32> to vector<2x8x8xf32>
    %34 = arith.divf %30, %33 : vector<2x8x8xf32>
    "tpu.trace_start"() <{level = 10 : i32, message = "bqk,bkd->bqd"}> : () -> ()
    %cst_16 = arith.constant dense<0.000000e+00> : vector<2x8x32xf32>
    %35 = tpu.matmul %34, %24, %cst_16 {dimension_numbers = #tpu.dot_dimension_numbers<[2], [1], [1], [2], [0, 0, 0, 1, 1, 2], [0], [0]>} : vector<2x8x8xf32>, vector<2x8x32xf32>, vector<2x8x32xf32> -> vector<2x8x32xf32>
    "tpu.trace_stop"() : () -> ()
    %36 = vector.extract_strided_slice %35 {offsets = [0, 0, 0], sizes = [1, 8, 32], strides = [1, 1, 1]} : vector<2x8x32xf32> to vector<1x8x32xf32>
    %37 = vector.shape_cast %36 : vector<1x8x32xf32> to vector<8x32xf32>
    %38 = vector.extract_strided_slice %35 {offsets = [1, 0, 0], sizes = [1, 8, 32], strides = [1, 1, 1]} : vector<2x8x32xf32> to vector<1x8x32xf32>
    %39 = vector.shape_cast %38 : vector<1x8x32xf32> to vector<8x32xf32>
    %40 = tpu.concatenate %37, %39 in 1 : vector<8x32xf32>, vector<8x32xf32> -> vector<8x64xf32>
    %c0_17 = arith.constant 0 : index
    %c0_18 = arith.constant 0 : index
    %c0_19 = arith.constant 0 : index
    %41 = vector.load %arg6[%c0_17, %c0_18, %c0_19] : memref<1x64x32xf32, #tpu.memory_space<vmem>>, vector<1x64x32xf32>
    %42 = vector.shape_cast %41 : vector<1x64x32xf32> to vector<64x32xf32>
    %cst_20 = arith.constant dense<0.000000e+00> : vector<8x32xf32>
    %43 = tpu.matmul %40, %42, %cst_20 {dimension_numbers = #tpu.dot_dimension_numbers<[1], [0], [0], [1], [0, 0, 1, 1], [], []>} : vector<8x64xf32>, vector<64x32xf32>, vector<8x32xf32> -> vector<8x32xf32>
    %c0_21 = arith.constant 0 : index
    %c0_22 = arith.constant 0 : index
    %c0_23 = arith.constant 0 : index
    %44 = vector.load %arg7[%c0_21, %c0_22, %c0_23] : memref<1x1x32xf32, #tpu.memory_space<vmem>>, vector<1x1x32xf32>
    %45 = vector.shape_cast %44 : vector<1x1x32xf32> to vector<1x32xf32>
    %46 = vector.broadcast %45 : vector<1x32xf32> to vector<8x32xf32>
    %47 = arith.addf %43, %46 : vector<8x32xf32>
    %48 = arith.addf %47, %3 : vector<8x32xf32>
    %cst_24 = arith.constant dense<0.000000e+00> : vector<8xf32>
    %49 = vector.multi_reduction <add>, %48, %cst_24 [1] : vector<8x32xf32> to vector<8xf32>
    %50 = vector.shape_cast %49 : vector<8xf32> to vector<8x1xf32>
    %cst_25 = arith.constant 3.200000e+01 : f32
    %51 = vector.broadcast %cst_25 : f32 to vector<8x1xf32>
    %52 = arith.divf %50, %51 : vector<8x1xf32>
    %53 = vector.broadcast %52 : vector<8x1xf32> to vector<8x32xf32>
    %54 = arith.subf %48, %53 : vector<8x32xf32>
    %55 = arith.mulf %54, %54 : vector<8x32xf32>
    %cst_26 = arith.constant dense<0.000000e+00> : vector<8xf32>
    %56 = vector.multi_reduction <add>, %55, %cst_26 [1] : vector<8x32xf32> to vector<8xf32>
    %57 = vector.shape_cast %56 : vector<8xf32> to vector<8x1xf32>
    %cst_27 = arith.constant 3.200000e+01 : f32
    %58 = vector.broadcast %cst_27 : f32 to vector<8x1xf32>
    %59 = arith.divf %57, %58 : vector<8x1xf32>
    %60 = vector.broadcast %52 : vector<8x1xf32> to vector<8x32xf32>
    %61 = arith.subf %48, %60 : vector<8x32xf32>
    %cst_28 = arith.constant 9.99999974E-6 : f32
    %62 = vector.broadcast %cst_28 : f32 to vector<8x1xf32>
    %63 = arith.addf %59, %62 : vector<8x1xf32>
    %64 = math.rsqrt %63 : vector<8x1xf32>
    %65 = vector.broadcast %64 : vector<8x1xf32> to vector<8x32xf32>
    %66 = arith.mulf %61, %65 : vector<8x32xf32>
    %c0_29 = arith.constant 0 : index
    %c0_30 = arith.constant 0 : index
    %c0_31 = arith.constant 0 : index
    %67 = vector.load %arg8[%c0_29, %c0_30, %c0_31] : memref<1x1x32xf32, #tpu.memory_space<vmem>>, vector<1x1x32xf32>
    %68 = vector.shape_cast %67 : vector<1x1x32xf32> to vector<1x32xf32>
    %69 = vector.broadcast %68 : vector<1x32xf32> to vector<8x32xf32>
    %70 = arith.mulf %66, %69 : vector<8x32xf32>
    %c0_32 = arith.constant 0 : index
    %c0_33 = arith.constant 0 : index
    %c0_34 = arith.constant 0 : index
    %71 = vector.load %arg9[%c0_32, %c0_33, %c0_34] : memref<1x1x32xf32, #tpu.memory_space<vmem>>, vector<1x1x32xf32>
    %72 = vector.shape_cast %71 : vector<1x1x32xf32> to vector<1x32xf32>
    %73 = vector.broadcast %72 : vector<1x32xf32> to vector<8x32xf32>
    %74 = arith.addf %70, %73 : vector<8x32xf32>
    %cst_35 = arith.constant 0.000000e+00 : f32
    %75 = vector.broadcast %cst_35 : f32 to vector<8x32xf32>
    %c0_36 = arith.constant 0 : index
    %c0_37 = arith.constant 0 : index
    %c0_38 = arith.constant 0 : index
    %76 = vector.load %arg10[%c0_36, %c0_37, %c0_38] : memref<1x32x128xf32, #tpu.memory_space<vmem>>, vector<1x32x128xf32>
    %77 = vector.shape_cast %76 : vector<1x32x128xf32> to vector<32x128xf32>
    %cst_39 = arith.constant dense<0.000000e+00> : vector<8x128xf32>
    %78 = tpu.matmul %74, %77, %cst_39 {dimension_numbers = #tpu.dot_dimension_numbers<[1], [0], [0], [1], [0, 0, 1, 1], [], []>} : vector<8x32xf32>, vector<32x128xf32>, vector<8x128xf32> -> vector<8x128xf32>
    %c0_40 = arith.constant 0 : index
    %c0_41 = arith.constant 0 : index
    %c0_42 = arith.constant 0 : index
    %79 = vector.load %arg11[%c0_40, %c0_41, %c0_42] : memref<1x1x128xf32, #tpu.memory_space<vmem>>, vector<1x1x128xf32>
    %80 = vector.shape_cast %79 : vector<1x1x128xf32> to vector<1x128xf32>
    %81 = vector.broadcast %80 : vector<1x128xf32> to vector<8x128xf32>
    %82 = arith.addf %78, %81 : vector<8x128xf32>
    %cst_43 = arith.constant 0.000000e+00 : f32
    %83 = vector.broadcast %cst_43 : f32 to vector<8x128xf32>
    %84 = arith.maximumf %82, %83 : vector<8x128xf32>
    %c0_44 = arith.constant 0 : index
    %c0_45 = arith.constant 0 : index
    %c0_46 = arith.constant 0 : index
    %85 = vector.load %arg12[%c0_44, %c0_45, %c0_46] : memref<1x128x32xf32, #tpu.memory_space<vmem>>, vector<1x128x32xf32>
    %86 = vector.shape_cast %85 : vector<1x128x32xf32> to vector<128x32xf32>
    %cst_47 = arith.constant dense<0.000000e+00> : vector<8x32xf32>
    %87 = tpu.matmul %84, %86, %cst_47 {dimension_numbers = #tpu.dot_dimension_numbers<[1], [0], [0], [1], [0, 0, 1, 1], [], []>} : vector<8x128xf32>, vector<128x32xf32>, vector<8x32xf32> -> vector<8x32xf32>
    %88 = arith.addf %75, %87 : vector<8x32xf32>
    %c0_48 = arith.constant 0 : index
    %c0_49 = arith.constant 0 : index
    %c0_50 = arith.constant 0 : index
    %89 = vector.load %arg13[%c0_48, %c0_49, %c0_50] : memref<1x1x32xf32, #tpu.memory_space<vmem>>, vector<1x1x32xf32>
    %90 = vector.shape_cast %89 : vector<1x1x32xf32> to vector<1x32xf32>
    %91 = vector.broadcast %90 : vector<1x32xf32> to vector<8x32xf32>
    %92 = arith.addf %88, %91 : vector<8x32xf32>
    %93 = arith.addf %92, %74 : vector<8x32xf32>
    %cst_51 = arith.constant dense<0.000000e+00> : vector<8xf32>
    %94 = vector.multi_reduction <add>, %93, %cst_51 [1] : vector<8x32xf32> to vector<8xf32>
    %95 = vector.shape_cast %94 : vector<8xf32> to vector<8x1xf32>
    %cst_52 = arith.constant 3.200000e+01 : f32
    %96 = vector.broadcast %cst_52 : f32 to vector<8x1xf32>
    %97 = arith.divf %95, %96 : vector<8x1xf32>
    %98 = vector.broadcast %97 : vector<8x1xf32> to vector<8x32xf32>
    %99 = arith.subf %93, %98 : vector<8x32xf32>
    %100 = arith.mulf %99, %99 : vector<8x32xf32>
    %cst_53 = arith.constant dense<0.000000e+00> : vector<8xf32>
    %101 = vector.multi_reduction <add>, %100, %cst_53 [1] : vector<8x32xf32> to vector<8xf32>
    %102 = vector.shape_cast %101 : vector<8xf32> to vector<8x1xf32>
    %cst_54 = arith.constant 3.200000e+01 : f32
    %103 = vector.broadcast %cst_54 : f32 to vector<8x1xf32>
    %104 = arith.divf %102, %103 : vector<8x1xf32>
    %105 = vector.broadcast %97 : vector<8x1xf32> to vector<8x32xf32>
    %106 = arith.subf %93, %105 : vector<8x32xf32>
    %cst_55 = arith.constant 9.99999974E-6 : f32
    %107 = vector.broadcast %cst_55 : f32 to vector<8x1xf32>
    %108 = arith.addf %104, %107 : vector<8x1xf32>
    %109 = math.rsqrt %108 : vector<8x1xf32>
    %110 = vector.broadcast %109 : vector<8x1xf32> to vector<8x32xf32>
    %111 = arith.mulf %106, %110 : vector<8x32xf32>
    %c0_56 = arith.constant 0 : index
    %c0_57 = arith.constant 0 : index
    %c0_58 = arith.constant 0 : index
    %112 = vector.load %arg14[%c0_56, %c0_57, %c0_58] : memref<1x1x32xf32, #tpu.memory_space<vmem>>, vector<1x1x32xf32>
    %113 = vector.shape_cast %112 : vector<1x1x32xf32> to vector<1x32xf32>
    %114 = vector.broadcast %113 : vector<1x32xf32> to vector<8x32xf32>
    %115 = arith.mulf %111, %114 : vector<8x32xf32>
    %c0_59 = arith.constant 0 : index
    %c0_60 = arith.constant 0 : index
    %c0_61 = arith.constant 0 : index
    %116 = vector.load %arg15[%c0_59, %c0_60, %c0_61] : memref<1x1x32xf32, #tpu.memory_space<vmem>>, vector<1x1x32xf32>
    %117 = vector.shape_cast %116 : vector<1x1x32xf32> to vector<1x32xf32>
    %118 = vector.broadcast %117 : vector<1x32xf32> to vector<8x32xf32>
    %119 = arith.addf %115, %118 : vector<8x32xf32>
    %c0_62 = arith.constant 0 : index
    %c0_63 = arith.constant 0 : index
    %120 = vector.load %arg19[%c0_62, %c0_63] : memref<8x32xf32, #tpu.memory_space<vmem>>, vector<8x32xf32>
    tpu.vector_store %arg19[%c0_62, %c0_63], %119 {strides = array<i32>} : memref<8x32xf32, #tpu.memory_space<vmem>>, vector<8x32xf32>,
    %c1_i32 = arith.constant 1 : i32
    %121 = arith.cmpi eq, %arg1, %c1_i32 : i32
    %122 = arith.extui %121 : i1 to i32
    %c0_i32_64 = arith.constant 0 : i32
    %123 = arith.cmpi ne, %122, %c0_i32_64 : i32
    scf.if %123 {
      %124 = vector.shape_cast %119 : vector<8x32xf32> to vector<1x8x32xf32>
      %cst_65 = arith.constant dense<0xFF800000> : vector<1x32xf32>
      %125 = vector.multi_reduction <maximumf>, %124, %cst_65 [1] : vector<1x8x32xf32> to vector<1x32xf32>
      %c0_66 = arith.constant 0 : index
      %c0_67 = arith.constant 0 : index
      %126 = vector.load %arg16[%c0_66, %c0_67] : memref<32x128xf32, #tpu.memory_space<vmem>>, vector<32x128xf32>
      %cst_68 = arith.constant dense<0.000000e+00> : vector<1x128xf32>
      %127 = tpu.matmul %125, %126, %cst_68 {dimension_numbers = #tpu.dot_dimension_numbers<[1], [0], [0], [1], [0, 0, 1, 1], [], []>} : vector<1x32xf32>, vector<32x128xf32>, vector<1x128xf32> -> vector<1x128xf32>
      %c0_69 = arith.constant 0 : index
      %c0_70 = arith.constant 0 : index
      %128 = vector.load %arg17[%c0_69, %c0_70] : memref<1x128xf32, #tpu.memory_space<vmem>>, vector<1x128xf32>
      %129 = arith.addf %127, %128 : vector<1x128xf32>
      %130 = tpu.iota {dimensions = array<i32: 1>} : vector<1x128xi32>
      %c4_i32 = arith.constant 4 : i32
      %131 = vector.broadcast %c4_i32 : i32 to vector<1x128xi32>
      %132 = arith.cmpi slt, %130, %131 : vector<1x128xi32>
      %cst_71 = arith.constant 0xFF800000 : f32
      %133 = vector.broadcast %cst_71 : f32 to vector<1x128xf32>
      %134 = arith.select %132, %129, %133 : vector<1x128xi1>, vector<1x128xf32>
      %cst_72 = arith.constant dense<0xFF800000> : vector<1xf32>
      %135 = vector.multi_reduction <maximumf>, %134, %cst_72 [1] : vector<1x128xf32> to vector<1xf32>
      %136 = vector.shape_cast %135 : vector<1xf32> to vector<1x1xf32>
      %137 = vector.broadcast %136 : vector<1x1xf32> to vector<1x128xf32>
      %138 = arith.subf %134, %137 : vector<1x128xf32>
      %139 = math.exp %138 : vector<1x128xf32>
      %cst_73 = arith.constant dense<0.000000e+00> : vector<1xf32>
      %140 = vector.multi_reduction <add>, %139, %cst_73 [1] : vector<1x128xf32> to vector<1xf32>
      %141 = vector.shape_cast %140 : vector<1xf32> to vector<1x1xf32>
      %142 = math.log %141 : vector<1x1xf32>
      %143 = vector.broadcast %142 : vector<1x1xf32> to vector<1x128xf32>
      %144 = arith.subf %138, %143 : vector<1x128xf32>
      %145 = vector.shape_cast %144 : vector<1x128xf32> to vector<1x1x128xf32>
      %c0_74 = arith.constant 0 : index
      %c0_75 = arith.constant 0 : index
      %c0_76 = arith.constant 0 : index
      %146 = vector.load %arg18[%c0_74, %c0_75, %c0_76] : memref<1x1x128xf32, #tpu.memory_space<vmem>>, vector<1x1x128xf32>
      tpu.vector_store %arg18[%c0_74, %c0_75, %c0_76], %145 {strides = array<i32>} : memref<1x1x128xf32, #tpu.memory_space<vmem>>, vector<1x1x128xf32>,
    } else {
    }
    return
  }
  func.func @transform_0(%arg0: i32, %arg1: i32) -> (i32, i32, i32) {
    %c0_i32 = arith.constant 0 : i32
    %c0_i32_0 = arith.constant 0 : i32
    %c0_i32_1 = arith.constant 0 : i32
    return %arg0, %c0_i32, %c0_i32_0 : i32, i32, i32
  }
  func.func @transform_1(%arg0: i32, %arg1: i32) -> (i32, i32, i32) {
    %c0_i32 = arith.constant 0 : i32
    %c0_i32_0 = arith.constant 0 : i32
    %c0_i32_1 = arith.constant 0 : i32
    return %arg1, %c0_i32, %c0_i32_0 : i32, i32, i32
  }
  func.func @transform_2(%arg0: i32, %arg1: i32) -> (i32, i32, i32) {
    %c0_i32 = arith.constant 0 : i32
    %c0_i32_0 = arith.constant 0 : i32
    %c0_i32_1 = arith.constant 0 : i32
    return %arg1, %c0_i32, %c0_i32_0 : i32, i32, i32
  }
  func.func @transform_3(%arg0: i32, %arg1: i32) -> (i32, i32, i32) {
    %c0_i32 = arith.constant 0 : i32
    %c0_i32_0 = arith.constant 0 : i32
    %c0_i32_1 = arith.constant 0 : i32
    return %arg1, %c0_i32, %c0_i32_0 : i32, i32, i32
  }
  func.func @transform_4(%arg0: i32, %arg1: i32) -> (i32, i32, i32) {
    %c0_i32 = arith.constant 0 : i32
    %c0_i32_0 = arith.constant 0 : i32
    %c0_i32_1 = arith.constant 0 : i32
    return %arg1, %c0_i32, %c0_i32_0 : i32, i32, i32
  }
  func.func @transform_5(%arg0: i32, %arg1: i32) -> (i32, i32, i32) {
    %c0_i32 = arith.constant 0 : i32
    %c0_i32_0 = arith.constant 0 : i32
    %c0_i32_1 = arith.constant 0 : i32
    return %arg1, %c0_i32, %c0_i32_0 : i32, i32, i32
  }
  func.func @transform_6(%arg0: i32, %arg1: i32) -> (i32, i32, i32) {
    %c0_i32 = arith.constant 0 : i32
    %c0_i32_0 = arith.constant 0 : i32
    %c0_i32_1 = arith.constant 0 : i32
    return %arg1, %c0_i32, %c0_i32_0 : i32, i32, i32
  }
  func.func @transform_7(%arg0: i32, %arg1: i32) -> (i32, i32, i32) {
    %c0_i32 = arith.constant 0 : i32
    %c0_i32_0 = arith.constant 0 : i32
    %c0_i32_1 = arith.constant 0 : i32
    return %arg1, %c0_i32, %c0_i32_0 : i32, i32, i32
  }
  func.func @transform_8(%arg0: i32, %arg1: i32) -> (i32, i32, i32) {
    %c0_i32 = arith.constant 0 : i32
    %c0_i32_0 = arith.constant 0 : i32
    %c0_i32_1 = arith.constant 0 : i32
    return %arg1, %c0_i32, %c0_i32_0 : i32, i32, i32
  }
  func.func @transform_9(%arg0: i32, %arg1: i32) -> (i32, i32, i32) {
    %c0_i32 = arith.constant 0 : i32
    %c0_i32_0 = arith.constant 0 : i32
    %c0_i32_1 = arith.constant 0 : i32
    return %arg1, %c0_i32, %c0_i32_0 : i32, i32, i32
  }
  func.func @transform_10(%arg0: i32, %arg1: i32) -> (i32, i32, i32) {
    %c0_i32 = arith.constant 0 : i32
    %c0_i32_0 = arith.constant 0 : i32
    %c0_i32_1 = arith.constant 0 : i32
    return %arg1, %c0_i32, %c0_i32_0 : i32, i32, i32
  }
  func.func @transform_11(%arg0: i32, %arg1: i32) -> (i32, i32, i32) {
    %c0_i32 = arith.constant 0 : i32
    %c0_i32_0 = arith.constant 0 : i32
    %c0_i32_1 = arith.constant 0 : i32
    return %arg1, %c0_i32, %c0_i32_0 : i32, i32, i32
  }
  func.func @transform_12(%arg0: i32, %arg1: i32) -> (i32, i32, i32) {
    %c0_i32 = arith.constant 0 : i32
    %c0_i32_0 = arith.constant 0 : i32
    %c0_i32_1 = arith.constant 0 : i32
    return %arg1, %c0_i32, %c0_i32_0 : i32, i32, i32
  }
  func.func @transform_13(%arg0: i32, %arg1: i32) -> (i32, i32, i32) {
    %c0_i32 = arith.constant 0 : i32
    %c0_i32_0 = arith.constant 0 : i32
    %c0_i32_1 = arith.constant 0 : i32
    return %arg1, %c0_i32, %c0_i32_0 : i32, i32, i32
  }
  func.func @transform_14(%arg0: i32, %arg1: i32) -> (i32, i32) {
    %c0_i32 = arith.constant 0 : i32
    %c0_i32_0 = arith.constant 0 : i32
    %c0_i32_1 = arith.constant 0 : i32
    return %c0_i32, %c0_i32_0 : i32, i32
  }
  func.func @transform_15(%arg0: i32, %arg1: i32) -> (i32, i32) {
    %c0_i32 = arith.constant 0 : i32
    %c0_i32_0 = arith.constant 0 : i32
    %c0_i32_1 = arith.constant 0 : i32
    return %c0_i32, %c0_i32_0 : i32, i32
  }
  func.func @transform_16(%arg0: i32, %arg1: i32) -> (i32, i32, i32) {
    %c0_i32 = arith.constant 0 : i32
    %c0_i32_0 = arith.constant 0 : i32
    %c0_i32_1 = arith.constant 0 : i32
    return %arg0, %c0_i32, %c0_i32_0 : i32, i32, i32
  }
}

</mosaic_0001>

<llo_original>
// kernel: tpu_custom_call.1
$region0: #{tpu_custom_call.1}
  #allocation0 [shape = 'u32[]', space=smem, size = 0x4, offset = 0x4, fixed_abs, tag = 'smem constant byte address 0x4 - core index']
  #allocation1 [shape = 'u32[144,128]{1,0:T(1,128)}', space=vmem, size = 0x12000, scoped, tag = 'internal scratch']
  #allocation2 [shape = 'f32[8,32]{1,0:T(8,128)}', space=vmem, size = 0x1000, scoped, tag = 'scratch operand']
  %s0 = inlined_call_operand.vmem [shape: f32[2,8,32], index: 0, kind: input, shape index: {}]
  %s1 = inlined_call_operand.vmem [shape: f32[2,32,64], index: 1, kind: input, shape index: {}]
  %s2 = inlined_call_operand.vmem [shape: f32[2,32,64], index: 2, kind: input, shape index: {}]
  %s3 = inlined_call_operand.vmem [shape: f32[2,32,64], index: 3, kind: input, shape index: {}]
  %s4 = inlined_call_operand.vmem [shape: f32[2,64,32], index: 4, kind: input, shape index: {}]
  %s5 = inlined_call_operand.vmem [shape: f32[2,1,32], index: 5, kind: input, shape index: {}]
  %s6 = inlined_call_operand.vmem [shape: f32[2,1,32], index: 6, kind: input, shape index: {}]
  %s7 = inlined_call_operand.vmem [shape: f32[2,1,32], index: 7, kind: input, shape index: {}]
  %s8 = inlined_call_operand.vmem [shape: f32[2,32,128], index: 8, kind: input, shape index: {}]
  %s9 = inlined_call_operand.vmem [shape: f32[2,1,128], index: 9, kind: input, shape index: {}]
  %s10 = inlined_call_operand.vmem [shape: f32[2,128,32], index: 10, kind: input, shape index: {}]
  %s11 = inlined_call_operand.vmem [shape: f32[2,1,32], index: 11, kind: input, shape index: {}]
  %s12 = inlined_call_operand.vmem [shape: f32[2,1,32], index: 12, kind: input, shape index: {}]
  %s13 = inlined_call_operand.vmem [shape: f32[2,1,32], index: 13, kind: input, shape index: {}]
  %s14 = inlined_call_operand.vmem [shape: f32[32,128], index: 14, kind: input, shape index: {}]
  %s15 = inlined_call_operand.vmem [shape: f32[1,128], index: 15, kind: input, shape index: {}]
  %s16 = inlined_call_operand.hbm [shape: f32[2,1,128], index: 16, kind: output, shape index: {}]
  %s17 = sld [smem:[#allocation0]]
  $region105: #{tpu_custom_call.1} parent=0
    _
  %s19 = ssub.s32 1, %s17
  %s20 = scalar_select 0, %s19, %s17
  $region1: #{tpu_custom_call.1} parent=0
    #allocation3 [shape = 'u8[1024]{0}', space=vmem, size = 0x400, scoped, tag = 'output window, operand 0']
    #allocation4 [shape = 's32[2]{0}', space=sflag, size = 0x8, scoped, tag = 'scoped memory for tpu_custom_call.1']
    %21 = vsyncpa [#allocation4], 0
    %s22 = scalar_lea.sflag [#allocation4], 1
    %23 = vsyncpa %s22, 0
    loop: start=0, step=1, limit=6
    $region2: #{tpu_custom_call.1} parent=1 // loop_pre_header
      _
    $region3: #{tpu_custom_call.1} parent=1 // loop_header
      %s25 = sphi 0, %s29
      %p26 = scmp.ge.s32.totalorder %s25, 6
      %s32 = sphi 0, %s44
      %s33 = sphi 0, %s40
      %s34 = sphi 0, %s32
      %s35 = sphi 0, %s33
      %s36 = sphi 0, %s34
      %s37 = sphi 0, %s35
      %s47 = sphi 0, %s49
      %s50 = sphi 0, %s47
      %s51 = sphi 0, %s50
      %s67 = sphi 0, %s51
      %s73 = sphi 0, %s75
      %s76 = sphi 0, %s73
      %s77 = sphi 0, %s76
      %s93 = sphi 0, %s77
      %s99 = sphi 0, %s101
      %s102 = sphi 0, %s99
      %s103 = sphi 0, %s102
      %s119 = sphi 0, %s103
      %s125 = sphi 0, %s127
      %s128 = sphi 0, %s125
      %s129 = sphi 0, %s128
      %s145 = sphi 0, %s129
      %s151 = sphi 0, %s153
      %s154 = sphi 0, %s151
      %s155 = sphi 0, %s154
      %s171 = sphi 0, %s155
      %s177 = sphi 0, %s179
      %s180 = sphi 0, %s177
      %s181 = sphi 0, %s180
      %s197 = sphi 0, %s181
      %s203 = sphi 0, %s205
      %s206 = sphi 0, %s203
      %s207 = sphi 0, %s206
      %s223 = sphi 0, %s207
      %s229 = sphi 0, %s231
      %s232 = sphi 0, %s229
      %s233 = sphi 0, %s232
      %s249 = sphi 0, %s233
      %s255 = sphi 0, %s257
      %s258 = sphi 0, %s255
      %s259 = sphi 0, %s258
      %s275 = sphi 0, %s259
      %s281 = sphi 0, %s283
      %s284 = sphi 0, %s281
      %s285 = sphi 0, %s284
      %s301 = sphi 0, %s285
      %s307 = sphi 0, %s309
      %s310 = sphi 0, %s307
      %s311 = sphi 0, %s310
      %s327 = sphi 0, %s311
      %s333 = sphi 0, %s335
      %s336 = sphi 0, %s333
      %s337 = sphi 0, %s336
      %s353 = sphi 0, %s337
      %s359 = sphi 0, %s361
      %s362 = sphi 0, %s359
      %s363 = sphi 0, %s362
      %s379 = sphi 0, %s363
      %s385 = sphi 0, %s387
      %s388 = sphi 0, %s385
      %s389 = sphi 0, %s388
      %s405 = sphi 0, %s389
      %s409 = sphi 0, %s409
      %s411 = sphi 0, %s409
      %s412 = sphi 0, %s411
      %s426 = sphi 0, %s412
      %s430 = sphi 0, %s430
      %s432 = sphi 0, %s430
      %s433 = sphi 0, %s432
      %s447 = sphi 0, %s433
      %s453 = sphi 0, %s455
      %s456 = sphi 0, %s453
      %s457 = sphi 0, %s456
      %s473 = sphi 0, %s457
    $region4: #{tpu_custom_call.1} parent=1 // loop_header_branch
      %28 = sbr.rel (%p26) target = $region8
    $region5: #{tpu_custom_call.1} parent=1 // loop_body
      %s30 = ssub.s32 %s25, 1
      %s31 = ssub.s32 %s25, 2
      %s38 = sadd.s32 1, %s33
      %p39 = scmp.ge.s32.totalorder %s38, 2
      %s40 = scalar_select %p39, 0, %s38
      %s41 = sadd.s32 1, %s32
      %s42 = scalar_select %p39, %s41, %s32
      %p43 = scmp.ge.s32.totalorder %s42, 2
      %s44 = scalar_select %p43, 0, %s42
      %s45 = ssub.s32 %s32, %s44
      %p46 = scmp.eq.s32.totalorder %s45, 0
      %s48 = sadd.s32 %s47, 1
      %s49 = scalar_select %p46, %s47, %s48
      %p52 = pneg %p46
      %p53 = scmp.eq.s32.totalorder %s25, 3
      %p54 = por %p52, %p53
      %p55 = scmp.ne.s32.totalorder %s47, %s50
      %p56 = scmp.eq.s32.totalorder %s25, 0
      %p57 = por %p55, %p56
      %p58 = scmp.ne.s32.totalorder %s47, %s50
      %p59 = scmp.eq.s32.totalorder %s30, 3
      %p60 = por %p58, %p59
      %p61 = scmp.ne.s32.totalorder %s50, %s51
      %p62 = scmp.eq.s32.totalorder %s30, 0
      %p63 = por %p61, %p62
      %p64 = scmp.ne.s32.totalorder %s50, %s51
      %p65 = scmp.eq.s32.totalorder %s31, 3
      %p66 = por %p64, %p65
      %p68 = scmp.ne.s32.totalorder %s51, %s67
      %p69 = scmp.eq.s32.totalorder %s31, 0
      %p70 = por %p68, %p69
      %s71 = ssub.s32 %s33, %s40
      %p72 = scmp.eq.s32.totalorder %s71, 0
      %s74 = sadd.s32 %s73, 1
      %s75 = scalar_select %p72, %s73, %s74
      %p78 = pneg %p72
      %p79 = scmp.eq.s32.totalorder %s25, 3
      %p80 = por %p78, %p79
      %p81 = scmp.ne.s32.totalorder %s73, %s76
      %p82 = scmp.eq.s32.totalorder %s25, 0
      %p83 = por %p81, %p82
      %p84 = scmp.ne.s32.totalorder %s73, %s76
      %p85 = scmp.eq.s32.totalorder %s30, 3
      %p86 = por %p84, %p85
      %p87 = scmp.ne.s32.totalorder %s76, %s77
      %p88 = scmp.eq.s32.totalorder %s30, 0
      %p89 = por %p87, %p88
      %p90 = scmp.ne.s32.totalorder %s76, %s77
      %p91 = scmp.eq.s32.totalorder %s31, 3
      %p92 = por %p90, %p91
      %p94 = scmp.ne.s32.totalorder %s77, %s93
      %p95 = scmp.eq.s32.totalorder %s31, 0
      %p96 = por %p94, %p95
      %s97 = ssub.s32 %s33, %s40
      %p98 = scmp.eq.s32.totalorder %s97, 0
      %s100 = sadd.s32 %s99, 1
      %s101 = scalar_select %p98, %s99, %s100
      %p104 = pneg %p98
      %p105 = scmp.eq.s32.totalorder %s25, 3
      %p106 = por %p104, %p105
      %p107 = scmp.ne.s32.totalorder %s99, %s102
      %p108 = scmp.eq.s32.totalorder %s25, 0
      %p109 = por %p107, %p108
      %p110 = scmp.ne.s32.totalorder %s99, %s102
      %p111 = scmp.eq.s32.totalorder %s30, 3
      %p112 = por %p110, %p111
      %p113 = scmp.ne.s32.totalorder %s102, %s103
      %p114 = scmp.eq.s32.totalorder %s30, 0
      %p115 = por %p113, %p114
      %p116 = scmp.ne.s32.totalorder %s102, %s103
      %p117 = scmp.eq.s32.totalorder %s31, 3
      %p118 = por %p116, %p117
      %p120 = scmp.ne.s32.totalorder %s103, %s119
      %p121 = scmp.eq.s32.totalorder %s31, 0
      %p122 = por %p120, %p121
      %s123 = ssub.s32 %s33, %s40
      %p124 = scmp.eq.s32.totalorder %s123, 0
      %s126 = sadd.s32 %s125, 1
      %s127 = scalar_select %p124, %s125, %s126
      %p130 = pneg %p124
      %p131 = scmp.eq.s32.totalorder %s25, 3
      %p132 = por %p130, %p131
      %p133 = scmp.ne.s32.totalorder %s125, %s128
      %p134 = scmp.eq.s32.totalorder %s25, 0
      %p135 = por %p133, %p134
      %p136 = scmp.ne.s32.totalorder %s125, %s128
      %p137 = scmp.eq.s32.totalorder %s30, 3
      %p138 = por %p136, %p137
      %p139 = scmp.ne.s32.totalorder %s128, %s129
      %p140 = scmp.eq.s32.totalorder %s30, 0
      %p141 = por %p139, %p140
      %p142 = scmp.ne.s32.totalorder %s128, %s129
      %p143 = scmp.eq.s32.totalorder %s31, 3
      %p144 = por %p142, %p143
      %p146 = scmp.ne.s32.totalorder %s129, %s145
      %p147 = scmp.eq.s32.totalorder %s31, 0
      %p148 = por %p146, %p147
      %s149 = ssub.s32 %s33, %s40
      %p150 = scmp.eq.s32.totalorder %s149, 0
      %s152 = sadd.s32 %s151, 1
      %s153 = scalar_select %p150, %s151, %s152
      %p156 = pneg %p150
      %p157 = scmp.eq.s32.totalorder %s25, 3
      %p158 = por %p156, %p157
      %p159 = scmp.ne.s32.totalorder %s151, %s154
      %p160 = scmp.eq.s32.totalorder %s25, 0
      %p161 = por %p159, %p160
      %p162 = scmp.ne.s32.totalorder %s151, %s154
      %p163 = scmp.eq.s32.totalorder %s30, 3
      %p164 = por %p162, %p163
      %p165 = scmp.ne.s32.totalorder %s154, %s155
      %p166 = scmp.eq.s32.totalorder %s30, 0
      %p167 = por %p165, %p166
      %p168 = scmp.ne.s32.totalorder %s154, %s155
      %p169 = scmp.eq.s32.totalorder %s31, 3
      %p170 = por %p168, %p169
      %p172 = scmp.ne.s32.totalorder %s155, %s171
      %p173 = scmp.eq.s32.totalorder %s31, 0
      %p174 = por %p172, %p173
      %s175 = ssub.s32 %s33, %s40
      %p176 = scmp.eq.s32.totalorder %s175, 0
      %s178 = sadd.s32 %s177, 1
      %s179 = scalar_select %p176, %s177, %s178
      %p182 = pneg %p176
      %p183 = scmp.eq.s32.totalorder %s25, 3
      %p184 = por %p182, %p183
      %p185 = scmp.ne.s32.totalorder %s177, %s180
      %p186 = scmp.eq.s32.totalorder %s25, 0
      %p187 = por %p185, %p186
      %p188 = scmp.ne.s32.totalorder %s177, %s180
      %p189 = scmp.eq.s32.totalorder %s30, 3
      %p190 = por %p188, %p189
      %p191 = scmp.ne.s32.totalorder %s180, %s181
      %p192 = scmp.eq.s32.totalorder %s30, 0
      %p193 = por %p191, %p192
      %p194 = scmp.ne.s32.totalorder %s180, %s181
      %p195 = scmp.eq.s32.totalorder %s31, 3
      %p196 = por %p194, %p195
      %p198 = scmp.ne.s32.totalorder %s181, %s197
      %p199 = scmp.eq.s32.totalorder %s31, 0
      %p200 = por %p198, %p199
      %s201 = ssub.s32 %s33, %s40
      %p202 = scmp.eq.s32.totalorder %s201, 0
      %s204 = sadd.s32 %s203, 1
      %s205 = scalar_select %p202, %s203, %s204
      %p208 = pneg %p202
      %p209 = scmp.eq.s32.totalorder %s25, 3
      %p210 = por %p208, %p209
      %p211 = scmp.ne.s32.totalorder %s203, %s206
      %p212 = scmp.eq.s32.totalorder %s25, 0
      %p213 = por %p211, %p212
      %p214 = scmp.ne.s32.totalorder %s203, %s206
      %p215 = scmp.eq.s32.totalorder %s30, 3
      %p216 = por %p214, %p215
      %p217 = scmp.ne.s32.totalorder %s206, %s207
      %p218 = scmp.eq.s32.totalorder %s30, 0
      %p219 = por %p217, %p218
      %p220 = scmp.ne.s32.totalorder %s206, %s207
      %p221 = scmp.eq.s32.totalorder %s31, 3
      %p222 = por %p220, %p221
      %p224 = scmp.ne.s32.totalorder %s207, %s223
      %p225 = scmp.eq.s32.totalorder %s31, 0
      %p226 = por %p224, %p225
      %s227 = ssub.s32 %s33, %s40
      %p228 = scmp.eq.s32.totalorder %s227, 0
      %s230 = sadd.s32 %s229, 1
      %s231 = scalar_select %p228, %s229, %s230
      %p234 = pneg %p228
      %p235 = scmp.eq.s32.totalorder %s25, 3
      %p236 = por %p234, %p235
      %p237 = scmp.ne.s32.totalorder %s229, %s232
      %p238 = scmp.eq.s32.totalorder %s25, 0
      %p239 = por %p237, %p238
      %p240 = scmp.ne.s32.totalorder %s229, %s232
      %p241 = scmp.eq.s32.totalorder %s30, 3
      %p242 = por %p240, %p241
      %p243 = scmp.ne.s32.totalorder %s232, %s233
      %p244 = scmp.eq.s32.totalorder %s30, 0
      %p245 = por %p243, %p244
      %p246 = scmp.ne.s32.totalorder %s232, %s233
      %p247 = scmp.eq.s32.totalorder %s31, 3
      %p248 = por %p246, %p247
      %p250 = scmp.ne.s32.totalorder %s233, %s249
      %p251 = scmp.eq.s32.totalorder %s31, 0
      %p252 = por %p250, %p251
      %s253 = ssub.s32 %s33, %s40
      %p254 = scmp.eq.s32.totalorder %s253, 0
      %s256 = sadd.s32 %s255, 1
      %s257 = scalar_select %p254, %s255, %s256
      %p260 = pneg %p254
      %p261 = scmp.eq.s32.totalorder %s25, 3
      %p262 = por %p260, %p261
      %p263 = scmp.ne.s32.totalorder %s255, %s258
      %p264 = scmp.eq.s32.totalorder %s25, 0
      %p265 = por %p263, %p264
      %p266 = scmp.ne.s32.totalorder %s255, %s258
      %p267 = scmp.eq.s32.totalorder %s30, 3
      %p268 = por %p266, %p267
      %p269 = scmp.ne.s32.totalorder %s258, %s259
      %p270 = scmp.eq.s32.totalorder %s30, 0
      %p271 = por %p269, %p270
      %p272 = scmp.ne.s32.totalorder %s258, %s259
      %p273 = scmp.eq.s32.totalorder %s31, 3
      %p274 = por %p272, %p273
      %p276 = scmp.ne.s32.totalorder %s259, %s275
      %p277 = scmp.eq.s32.totalorder %s31, 0
      %p278 = por %p276, %p277
      %s279 = ssub.s32 %s33, %s40
      %p280 = scmp.eq.s32.totalorder %s279, 0
      %s282 = sadd.s32 %s281, 1
      %s283 = scalar_select %p280, %s281, %s282
      %p286 = pneg %p280
      %p287 = scmp.eq.s32.totalorder %s25, 3
      %p288 = por %p286, %p287
      %p289 = scmp.ne.s32.totalorder %s281, %s284
      %p290 = scmp.eq.s32.totalorder %s25, 0
      %p291 = por %p289, %p290
      %p292 = scmp.ne.s32.totalorder %s281, %s284
      %p293 = scmp.eq.s32.totalorder %s30, 3
      %p294 = por %p292, %p293
      %p295 = scmp.ne.s32.totalorder %s284, %s285
      %p296 = scmp.eq.s32.totalorder %s30, 0
      %p297 = por %p295, %p296
      %p298 = scmp.ne.s32.totalorder %s284, %s285
      %p299 = scmp.eq.s32.totalorder %s31, 3
      %p300 = por %p298, %p299
      %p302 = scmp.ne.s32.totalorder %s285, %s301
      %p303 = scmp.eq.s32.totalorder %s31, 0
      %p304 = por %p302, %p303
      %s305 = ssub.s32 %s33, %s40
      %p306 = scmp.eq.s32.totalorder %s305, 0
      %s308 = sadd.s32 %s307, 1
      %s309 = scalar_select %p306, %s307, %s308
      %p312 = pneg %p306
      %p313 = scmp.eq.s32.totalorder %s25, 3
      %p314 = por %p312, %p313
      %p315 = scmp.ne.s32.totalorder %s307, %s310
      %p316 = scmp.eq.s32.totalorder %s25, 0
      %p317 = por %p315, %p316
      %p318 = scmp.ne.s32.totalorder %s307, %s310
      %p319 = scmp.eq.s32.totalorder %s30, 3
      %p320 = por %p318, %p319
      %p321 = scmp.ne.s32.totalorder %s310, %s311
      %p322 = scmp.eq.s32.totalorder %s30, 0
      %p323 = por %p321, %p322
      %p324 = scmp.ne.s32.totalorder %s310, %s311
      %p325 = scmp.eq.s32.totalorder %s31, 3
      %p326 = por %p324, %p325
      %p328 = scmp.ne.s32.totalorder %s311, %s327
      %p329 = scmp.eq.s32.totalorder %s31, 0
      %p330 = por %p328, %p329
      %s331 = ssub.s32 %s33, %s40
      %p332 = scmp.eq.s32.totalorder %s331, 0
      %s334 = sadd.s32 %s333, 1
      %s335 = scalar_select %p332, %s333, %s334
      %p338 = pneg %p332
      %p339 = scmp.eq.s32.totalorder %s25, 3
      %p340 = por %p338, %p339
      %p341 = scmp.ne.s32.totalorder %s333, %s336
      %p342 = scmp.eq.s32.totalorder %s25, 0
      %p343 = por %p341, %p342
      %p344 = scmp.ne.s32.totalorder %s333, %s336
      %p345 = scmp.eq.s32.totalorder %s30, 3
      %p346 = por %p344, %p345
      %p347 = scmp.ne.s32.totalorder %s336, %s337
      %p348 = scmp.eq.s32.totalorder %s30, 0
      %p349 = por %p347, %p348
      %p350 = scmp.ne.s32.totalorder %s336, %s337
      %p351 = scmp.eq.s32.totalorder %s31, 3
      %p352 = por %p350, %p351
      %p354 = scmp.ne.s32.totalorder %s337, %s353
      %p355 = scmp.eq.s32.totalorder %s31, 0
      %p356 = por %p354, %p355
      %s357 = ssub.s32 %s33, %s40
      %p358 = scmp.eq.s32.totalorder %s357, 0
      %s360 = sadd.s32 %s359, 1
      %s361 = scalar_select %p358, %s359, %s360
      %p364 = pneg %p358
      %p365 = scmp.eq.s32.totalorder %s25, 3
      %p366 = por %p364, %p365
      %p367 = scmp.ne.s32.totalorder %s359, %s362
      %p368 = scmp.eq.s32.totalorder %s25, 0
      %p369 = por %p367, %p368
      %p370 = scmp.ne.s32.totalorder %s359, %s362
      %p371 = scmp.eq.s32.totalorder %s30, 3
      %p372 = por %p370, %p371
      %p373 = scmp.ne.s32.totalorder %s362, %s363
      %p374 = scmp.eq.s32.totalorder %s30, 0
      %p375 = por %p373, %p374
      %p376 = scmp.ne.s32.totalorder %s362, %s363
      %p377 = scmp.eq.s32.totalorder %s31, 3
      %p378 = por %p376, %p377
      %p380 = scmp.ne.s32.totalorder %s363, %s379
      %p381 = scmp.eq.s32.totalorder %s31, 0
      %p382 = por %p380, %p381
      %s383 = ssub.s32 %s33, %s40
      %p384 = scmp.eq.s32.totalorder %s383, 0
      %s386 = sadd.s32 %s385, 1
      %s387 = scalar_select %p384, %s385, %s386
      %p390 = pneg %p384
      %p391 = scmp.eq.s32.totalorder %s25, 3
      %p392 = por %p390, %p391
      %p393 = scmp.ne.s32.totalorder %s385, %s388
      %p394 = scmp.eq.s32.totalorder %s25, 0
      %p395 = por %p393, %p394
      %p396 = scmp.ne.s32.totalorder %s385, %s388
      %p397 = scmp.eq.s32.totalorder %s30, 3
      %p398 = por %p396, %p397
      %p399 = scmp.ne.s32.totalorder %s388, %s389
      %p400 = scmp.eq.s32.totalorder %s30, 0
      %p401 = por %p399, %p400
      %p402 = scmp.ne.s32.totalorder %s388, %s389
      %p403 = scmp.eq.s32.totalorder %s31, 3
      %p404 = por %p402, %p403
      %p406 = scmp.ne.s32.totalorder %s389, %s405
      %p407 = scmp.eq.s32.totalorder %s31, 0
      %p408 = por %p406, %p407
      %s410 = sadd.s32 %s409, 1
      %p413 = scmp.eq.s32.totalorder %s25, 3
      %p414 = scmp.ne.s32.totalorder %s409, %s411
      %p415 = scmp.eq.s32.totalorder %s25, 0
      %p416 = por %p414, %p415
      %p417 = scmp.ne.s32.totalorder %s409, %s411
      %p418 = scmp.eq.s32.totalorder %s30, 3
      %p419 = por %p417, %p418
      %p420 = scmp.ne.s32.totalorder %s411, %s412
      %p421 = scmp.eq.s32.totalorder %s30, 0
      %p422 = por %p420, %p421
      %p423 = scmp.ne.s32.totalorder %s411, %s412
      %p424 = scmp.eq.s32.totalorder %s31, 3
      %p425 = por %p423, %p424
      %p427 = scmp.ne.s32.totalorder %s412, %s426
      %p428 = scmp.eq.s32.totalorder %s31, 0
      %p429 = por %p427, %p428
      %s431 = sadd.s32 %s430, 1
      %p434 = scmp.eq.s32.totalorder %s25, 3
      %p435 = scmp.ne.s32.totalorder %s430, %s432
      %p436 = scmp.eq.s32.totalorder %s25, 0
      %p437 = por %p435, %p436
      %p438 = scmp.ne.s32.totalorder %s430, %s432
      %p439 = scmp.eq.s32.totalorder %s30, 3
      %p440 = por %p438, %p439
      %p441 = scmp.ne.s32.totalorder %s432, %s433
      %p442 = scmp.eq.s32.totalorder %s30, 0
      %p443 = por %p441, %p442
      %p444 = scmp.ne.s32.totalorder %s432, %s433
      %p445 = scmp.eq.s32.totalorder %s31, 3
      %p446 = por %p444, %p445
      %p448 = scmp.ne.s32.totalorder %s433, %s447
      %p449 = scmp.eq.s32.totalorder %s31, 0
      %p450 = por %p448, %p449
      %s451 = ssub.s32 %s32, %s44
      %p452 = scmp.eq.s32.totalorder %s451, 0
      %s454 = sadd.s32 %s453, 1
      %s455 = scalar_select %p452, %s453, %s454
      %p458 = pneg %p452
      %p459 = scmp.eq.s32.totalorder %s25, 3
      %p460 = por %p458, %p459
      %p461 = scmp.ne.s32.totalorder %s453, %s456
      %p462 = scmp.eq.s32.totalorder %s25, 0
      %p463 = por %p461, %p462
      %p464 = scmp.ne.s32.totalorder %s453, %s456
      %p465 = scmp.eq.s32.totalorder %s30, 3
      %p466 = por %p464, %p465
      %p467 = scmp.ne.s32.totalorder %s456, %s457
      %p468 = scmp.eq.s32.totalorder %s30, 0
      %p469 = por %p467, %p468
      %p470 = scmp.ne.s32.totalorder %s456, %s457
      %p471 = scmp.eq.s32.totalorder %s31, 3
      %p472 = por %p470, %p471
      %p474 = scmp.ne.s32.totalorder %s457, %s473
      %p475 = scmp.eq.s32.totalorder %s31, 0
      %p476 = por %p474, %p475
      %p477 = scmp.le.s32.totalorder 1, %s25
      %p478 = scmp.lt.s32.totalorder %s25, 5
      %p479 = pnand %p477, %p478
      %p480 = pneg %p479
      // Predicated region
      $region9: #{tpu_custom_call.1} parent=5 // pred_check
        _
      $region10: #{tpu_custom_call.1} parent=5 // pred_check_branch
        %482 = sbr.rel (%p479) target = $region12
      $region11: #{tpu_custom_call.1} parent=5 // pred_region
        %s483 = ssub.s32 %s25, 1
        // Predicated region
        $region13: #{tpu_custom_call.1} parent=11 // pred_check
          %p484 = pneg %p422
        $region14: #{tpu_custom_call.1} parent=11 // pred_check_branch
          %486 = sbr.rel (%p484) target = $region16
        $region15: #{tpu_custom_call.1} parent=11 // pred_region
          _
        $region16: #{tpu_custom_call.1} parent=11 // pred_fallthru
          _
        // Predicated region
        $region17: #{tpu_custom_call.1} parent=11 // pred_check
          %p487 = pneg %p443
        $region18: #{tpu_custom_call.1} parent=11 // pred_check_branch
          %489 = sbr.rel (%p487) target = $region20
        $region19: #{tpu_custom_call.1} parent=11 // pred_region
          _
        $region20: #{tpu_custom_call.1} parent=11 // pred_fallthru
          _
      $region12: #{tpu_custom_call.1} parent=5 // pred_fallthru
        _
      %p490 = scmp.lt.s32.totalorder %s25, 4
      // Predicated region
      $region21: #{tpu_custom_call.1} parent=5 // pred_check
        %p491 = pneg %p490
      $region22: #{tpu_custom_call.1} parent=5 // pred_check_branch
        %493 = sbr.rel (%p491) target = $region24
      $region23: #{tpu_custom_call.1} parent=5 // pred_region
        // Predicated region
        $region25: #{tpu_custom_call.1} parent=23 // pred_check
          %p494 = pneg %p57
        $region26: #{tpu_custom_call.1} parent=23 // pred_check_branch
          %496 = sbr.rel (%p494) target = $region28
        $region27: #{tpu_custom_call.1} parent=23 // pred_region
          %p497 = scmp.lt.s32.totalorder %s32, 1
          %s498 = scalar_select %p497, %s32, 1
          %s499 = smul.addr %s498, 8
          %s500 = scalar_lea.vmem %s0, %s499
        $region28: #{tpu_custom_call.1} parent=23 // pred_fallthru
          _
        // Predicated region
        $region29: #{tpu_custom_call.1} parent=23 // pred_check
          %p501 = pneg %p83
        $region30: #{tpu_custom_call.1} parent=23 // pred_check_branch
          %503 = sbr.rel (%p501) target = $region32
        $region31: #{tpu_custom_call.1} parent=23 // pred_region
          %p504 = scmp.lt.s32.totalorder %s33, 1
          %s505 = scalar_select %p504, %s33, 1
          %s506 = smul.addr %s505, 4
          %s507 = smul.addr %s506, 8
          %s508 = scalar_lea.vmem %s1, %s507
        $region32: #{tpu_custom_call.1} parent=23 // pred_fallthru
          _
        // Predicated region
        $region33: #{tpu_custom_call.1} parent=23 // pred_check
          %p509 = pneg %p109
        $region34: #{tpu_custom_call.1} parent=23 // pred_check_branch
          %511 = sbr.rel (%p509) target = $region36
        $region35: #{tpu_custom_call.1} parent=23 // pred_region
          %p512 = scmp.lt.s32.totalorder %s33, 1
          %s513 = scalar_select %p512, %s33, 1
          %s514 = smul.addr %s513, 4
          %s515 = smul.addr %s514, 8
          %s516 = scalar_lea.vmem %s2, %s515
        $region36: #{tpu_custom_call.1} parent=23 // pred_fallthru
          _
        // Predicated region
        $region37: #{tpu_custom_call.1} parent=23 // pred_check
          %p517 = pneg %p135
        $region38: #{tpu_custom_call.1} parent=23 // pred_check_branch
          %519 = sbr.rel (%p517) target = $region40
        $region39: #{tpu_custom_call.1} parent=23 // pred_region
          %p520 = scmp.lt.s32.totalorder %s33, 1
          %s521 = scalar_select %p520, %s33, 1
          %s522 = smul.addr %s521, 4
          %s523 = smul.addr %s522, 8
          %s524 = scalar_lea.vmem %s3, %s523
        $region40: #{tpu_custom_call.1} parent=23 // pred_fallthru
          _
        // Predicated region
        $region41: #{tpu_custom_call.1} parent=23 // pred_check
          %p525 = pneg %p161
        $region42: #{tpu_custom_call.1} parent=23 // pred_check_branch
          %527 = sbr.rel (%p525) target = $region44
        $region43: #{tpu_custom_call.1} parent=23 // pred_region
          %p528 = scmp.lt.s32.totalorder %s33, 1
          %s529 = scalar_select %p528, %s33, 1
          %s530 = smul.addr %s529, 8
          %s531 = smul.addr %s530, 8
          %s532 = scalar_lea.vmem %s4, %s531
        $region44: #{tpu_custom_call.1} parent=23 // pred_fallthru
          _
        // Predicated region
        $region45: #{tpu_custom_call.1} parent=23 // pred_check
          %p533 = pneg %p187
        $region46: #{tpu_custom_call.1} parent=23 // pred_check_branch
          %535 = sbr.rel (%p533) target = $region48
        $region47: #{tpu_custom_call.1} parent=23 // pred_region
          %p536 = scmp.lt.s32.totalorder %s33, 1
          %s537 = scalar_select %p536, %s33, 1
          %s538 = scalar_lea.vmem %s5, %s537
        $region48: #{tpu_custom_call.1} parent=23 // pred_fallthru
          _
        // Predicated region
        $region49: #{tpu_custom_call.1} parent=23 // pred_check
          %p539 = pneg %p213
        $region50: #{tpu_custom_call.1} parent=23 // pred_check_branch
          %541 = sbr.rel (%p539) target = $region52
        $region51: #{tpu_custom_call.1} parent=23 // pred_region
          %p542 = scmp.lt.s32.totalorder %s33, 1
          %s543 = scalar_select %p542, %s33, 1
          %s544 = scalar_lea.vmem %s6, %s543
        $region52: #{tpu_custom_call.1} parent=23 // pred_fallthru
          _
        // Predicated region
        $region53: #{tpu_custom_call.1} parent=23 // pred_check
          %p545 = pneg %p239
        $region54: #{tpu_custom_call.1} parent=23 // pred_check_branch
          %547 = sbr.rel (%p545) target = $region56
        $region55: #{tpu_custom_call.1} parent=23 // pred_region
          %p548 = scmp.lt.s32.totalorder %s33, 1
          %s549 = scalar_select %p548, %s33, 1
          %s550 = scalar_lea.vmem %s7, %s549
        $region56: #{tpu_custom_call.1} parent=23 // pred_fallthru
          _
        // Predicated region
        $region57: #{tpu_custom_call.1} parent=23 // pred_check
          %p551 = pneg %p265
        $region58: #{tpu_custom_call.1} parent=23 // pred_check_branch
          %553 = sbr.rel (%p551) target = $region60
        $region59: #{tpu_custom_call.1} parent=23 // pred_region
          %p554 = scmp.lt.s32.totalorder %s33, 1
          %s555 = scalar_select %p554, %s33, 1
          %s556 = smul.addr %s555, 4
          %s557 = smul.addr %s556, 8
          %s558 = scalar_lea.vmem %s8, %s557
        $region60: #{tpu_custom_call.1} parent=23 // pred_fallthru
          _
        // Predicated region
        $region61: #{tpu_custom_call.1} parent=23 // pred_check
          %p559 = pneg %p291
        $region62: #{tpu_custom_call.1} parent=23 // pred_check_branch
          %561 = sbr.rel (%p559) target = $region64
        $region63: #{tpu_custom_call.1} parent=23 // pred_region
          %p562 = scmp.lt.s32.totalorder %s33, 1
          %s563 = scalar_select %p562, %s33, 1
          %s564 = scalar_lea.vmem %s9, %s563
        $region64: #{tpu_custom_call.1} parent=23 // pred_fallthru
          _
        // Predicated region
        $region65: #{tpu_custom_call.1} parent=23 // pred_check
          %p565 = pneg %p317
        $region66: #{tpu_custom_call.1} parent=23 // pred_check_branch
          %567 = sbr.rel (%p565) target = $region68
        $region67: #{tpu_custom_call.1} parent=23 // pred_region
          %p568 = scmp.lt.s32.totalorder %s33, 1
          %s569 = scalar_select %p568, %s33, 1
          %s570 = smul.addr %s569, 16
          %s571 = smul.addr %s570, 8
          %s572 = scalar_lea.vmem %s10, %s571
        $region68: #{tpu_custom_call.1} parent=23 // pred_fallthru
          _
        // Predicated region
        $region69: #{tpu_custom_call.1} parent=23 // pred_check
          %p573 = pneg %p343
        $region70: #{tpu_custom_call.1} parent=23 // pred_check_branch
          %575 = sbr.rel (%p573) target = $region72
        $region71: #{tpu_custom_call.1} parent=23 // pred_region
          %p576 = scmp.lt.s32.totalorder %s33, 1
          %s577 = scalar_select %p576, %s33, 1
          %s578 = scalar_lea.vmem %s11, %s577
        $region72: #{tpu_custom_call.1} parent=23 // pred_fallthru
          _
        // Predicated region
        $region73: #{tpu_custom_call.1} parent=23 // pred_check
          %p579 = pneg %p369
        $region74: #{tpu_custom_call.1} parent=23 // pred_check_branch
          %581 = sbr.rel (%p579) target = $region76
        $region75: #{tpu_custom_call.1} parent=23 // pred_region
          %p582 = scmp.lt.s32.totalorder %s33, 1
          %s583 = scalar_select %p582, %s33, 1
          %s584 = scalar_lea.vmem %s12, %s583
        $region76: #{tpu_custom_call.1} parent=23 // pred_fallthru
          _
        // Predicated region
        $region77: #{tpu_custom_call.1} parent=23 // pred_check
          %p585 = pneg %p395
        $region78: #{tpu_custom_call.1} parent=23 // pred_check_branch
          %587 = sbr.rel (%p585) target = $region80
        $region79: #{tpu_custom_call.1} parent=23 // pred_region
          %p588 = scmp.lt.s32.totalorder %s33, 1
          %s589 = scalar_select %p588, %s33, 1
          %s590 = scalar_lea.vmem %s13, %s589
        $region80: #{tpu_custom_call.1} parent=23 // pred_fallthru
          _
      $region24: #{tpu_custom_call.1} parent=5 // pred_fallthru
        _
      %p591 = scmp.le.s32.totalorder 1, %s25
      %p592 = scmp.lt.s32.totalorder %s25, 5
      %p593 = pnand %p591, %p592
      %p594 = pneg %p593
      // Predicated region
      $region81: #{tpu_custom_call.1} parent=5 // pred_check
        _
      $region82: #{tpu_custom_call.1} parent=5 // pred_check_branch
        %596 = sbr.rel (%p593) target = $region84
      $region83: #{tpu_custom_call.1} parent=5 // pred_region
        %s597 = ssub.s32 %s25, 1
        %p598 = scmp.lt.s32.totalorder %s34, 1
        %s599 = scalar_select %p598, %s34, 1
        %s600 = smul.addr %s599, 8
        %s601 = scalar_lea.vmem %s0, %s600
        %p602 = pneg %p63
        %p603 = pneg %p60
        %p604 = scmp.lt.s32.totalorder %s35, 1
        %s605 = scalar_select %p604, %s35, 1
        %s606 = smul.addr %s605, 4
        %s607 = smul.addr %s606, 8
        %s608 = scalar_lea.vmem %s1, %s607
        %p609 = pneg %p89
        %p610 = pneg %p86
        %p611 = scmp.lt.s32.totalorder %s35, 1
        %s612 = scalar_select %p611, %s35, 1
        %s613 = smul.addr %s612, 4
        %s614 = smul.addr %s613, 8
        %s615 = scalar_lea.vmem %s2, %s614
        %p616 = pneg %p115
        %p617 = pneg %p112
        %p618 = scmp.lt.s32.totalorder %s35, 1
        %s619 = scalar_select %p618, %s35, 1
        %s620 = smul.addr %s619, 4
        %s621 = smul.addr %s620, 8
        %s622 = scalar_lea.vmem %s3, %s621
        %p623 = pneg %p141
        %p624 = pneg %p138
        %p625 = scmp.lt.s32.totalorder %s35, 1
        %s626 = scalar_select %p625, %s35, 1
        %s627 = smul.addr %s626, 8
        %s628 = smul.addr %s627, 8
        %s629 = scalar_lea.vmem %s4, %s628
        %p630 = pneg %p167
        %p631 = pneg %p164
        %p632 = scmp.lt.s32.totalorder %s35, 1
        %s633 = scalar_select %p632, %s35, 1
        %s634 = scalar_lea.vmem %s5, %s633
        %p635 = pneg %p193
        %p636 = pneg %p190
        %p637 = scmp.lt.s32.totalorder %s35, 1
        %s638 = scalar_select %p637, %s35, 1
        %s639 = scalar_lea.vmem %s6, %s638
        %p640 = pneg %p219
        %p641 = pneg %p216
        %p642 = scmp.lt.s32.totalorder %s35, 1
        %s643 = scalar_select %p642, %s35, 1
        %s644 = scalar_lea.vmem %s7, %s643
        %p645 = pneg %p245
        %p646 = pneg %p242
        %p647 = scmp.lt.s32.totalorder %s35, 1
        %s648 = scalar_select %p647, %s35, 1
        %s649 = smul.addr %s648, 4
        %s650 = smul.addr %s649, 8
        %s651 = scalar_lea.vmem %s8, %s650
        %p652 = pneg %p271
        %p653 = pneg %p268
        %p654 = scmp.lt.s32.totalorder %s35, 1
        %s655 = scalar_select %p654, %s35, 1
        %s656 = scalar_lea.vmem %s9, %s655
        %p657 = pneg %p297
        %p658 = pneg %p294
        %p659 = scmp.lt.s32.totalorder %s35, 1
        %s660 = scalar_select %p659, %s35, 1
        %s661 = smul.addr %s660, 16
        %s662 = smul.addr %s661, 8
        %s663 = scalar_lea.vmem %s10, %s662
        %p664 = pneg %p323
        %p665 = pneg %p320
        %p666 = scmp.lt.s32.totalorder %s35, 1
        %s667 = scalar_select %p666, %s35, 1
        %s668 = scalar_lea.vmem %s11, %s667
        %p669 = pneg %p349
        %p670 = pneg %p346
        %p671 = scmp.lt.s32.totalorder %s35, 1
        %s672 = scalar_select %p671, %s35, 1
        %s673 = scalar_lea.vmem %s12, %s672
        %p674 = pneg %p375
        %p675 = pneg %p372
        %p676 = scmp.lt.s32.totalorder %s35, 1
        %s677 = scalar_select %p676, %s35, 1
        %s678 = scalar_lea.vmem %s13, %s677
        %p679 = pneg %p401
        %p680 = pneg %p398
        %p681 = pneg %p422
        %p682 = pneg %p419
        %p683 = pneg %p443
        %p684 = pneg %p440
        %p685 = pneg %p469
        %p686 = pneg %p466
        %s687 = sand.u32 %s456, 1
        %s688 = scalar_lea.sflag [#allocation4], %s687
        %s689 = sand.u32 %s456, 1
        %s690 = scalar_lea.vmem [#allocation3], %s689
        %p691 = scmp.lt.s32.totalorder %s34, 1
        %s692 = scalar_select %p691, %s34, 1
        %s693 = smul.addr %s692, 8
        %s694 = scalar_lea.vmem %s0, %s693
        %p695 = scmp.lt.s32.totalorder %s35, 1
        %s696 = scalar_select %p695, %s35, 1
        %s697 = smul.addr %s696, 4
        %s698 = smul.addr %s697, 8
        %s699 = scalar_lea.vmem %s1, %s698
        %p700 = scmp.lt.s32.totalorder %s35, 1
        %s701 = scalar_select %p700, %s35, 1
        %s702 = smul.addr %s701, 4
        %s703 = smul.addr %s702, 8
        %s704 = scalar_lea.vmem %s2, %s703
        %p705 = scmp.lt.s32.totalorder %s35, 1
        %s706 = scalar_select %p705, %s35, 1
        %s707 = smul.addr %s706, 4
        %s708 = smul.addr %s707, 8
        %s709 = scalar_lea.vmem %s3, %s708
        %p710 = scmp.lt.s32.totalorder %s35, 1
        %s711 = scalar_select %p710, %s35, 1
        %s712 = smul.addr %s711, 8
        %s713 = smul.addr %s712, 8
        %s714 = scalar_lea.vmem %s4, %s713
        %p715 = scmp.lt.s32.totalorder %s35, 1
        %s716 = scalar_select %p715, %s35, 1
        %s717 = scalar_lea.vmem %s5, %s716
        %p718 = scmp.lt.s32.totalorder %s35, 1
        %s719 = scalar_select %p718, %s35, 1
        %s720 = scalar_lea.vmem %s6, %s719
        %p721 = scmp.lt.s32.totalorder %s35, 1
        %s722 = scalar_select %p721, %s35, 1
        %s723 = scalar_lea.vmem %s7, %s722
        %p724 = scmp.lt.s32.totalorder %s35, 1
        %s725 = scalar_select %p724, %s35, 1
        %s726 = smul.addr %s725, 4
        %s727 = smul.addr %s726, 8
        %s728 = scalar_lea.vmem %s8, %s727
        %p729 = scmp.lt.s32.totalorder %s35, 1
        %s730 = scalar_select %p729, %s35, 1
        %s731 = scalar_lea.vmem %s9, %s730
        %p732 = scmp.lt.s32.totalorder %s35, 1
        %s733 = scalar_select %p732, %s35, 1
        %s734 = smul.addr %s733, 16
        %s735 = smul.addr %s734, 8
        %s736 = scalar_lea.vmem %s10, %s735
        %p737 = scmp.lt.s32.totalorder %s35, 1
        %s738 = scalar_select %p737, %s35, 1
        %s739 = scalar_lea.vmem %s11, %s738
        %p740 = scmp.lt.s32.totalorder %s35, 1
        %s741 = scalar_select %p740, %s35, 1
        %s742 = scalar_lea.vmem %s12, %s741
        %p743 = scmp.lt.s32.totalorder %s35, 1
        %s744 = scalar_select %p743, %s35, 1
        %s745 = scalar_lea.vmem %s13, %s744
        %p746 = scmp.eq.s32.totalorder %s35, 0
        // Predicated region
        $region85: #{tpu_custom_call.1} parent=83 // pred_check
          %p747 = pneg %p746
        $region86: #{tpu_custom_call.1} parent=83 // pred_check_branch
          %749 = sbr.rel (%p747) target = $region88
        $region87: #{tpu_custom_call.1} parent=83 // pred_region
          %v750 = vld [vmem:[%s694] sm:$0xff]
          %vm751 = vcmask 261120
          %752 = vst.msk [vmem:[#allocation2] sm:$0xff] %vm751, %v750
        $region88: #{tpu_custom_call.1} parent=83 // pred_fallthru
          _
        %v753 = vld [vmem:[#allocation2] sm:$0xff]
        %v754 = vld [vmem:[%s699] sm:$0xff]
        %v755 = vld [vmem:[%s699 + $0x8] sm:$0xff]
        %v756 = vld [vmem:[%s699 + $0x10] sm:$0xff]
        %v757 = vld [vmem:[%s699 + $0x18] sm:$0xff]
        %vm758 = vcmask 261120
        %v760 = vsel %vm758, %v753, 0
        %762 = vmatprep.subr.mxu0 0.0
        %763 = vmatpush1.msra.mxu0 %v754
        %764 = vmatprep.subr.mxu0 0.0
        %765 = vmatpush1.msra.mxu0 %v755
        %766 = vmatprep.subr.mxu0 0.0
        %767 = vmatpush1.msra.mxu0 %v756
        %768 = vmatprep.subr.mxu0 0.0
        %769 = vmatpush1.msra.mxu0 %v757
        %770 = vmatprep.subr.mxu0 0.0
        %771 = vmatpush1.msra.mxu0 0.0
        %772 = vmatprep.subr.mxu0 0.0
        %773 = vmatpush1.msra.mxu0 0.0
        %774 = vmatprep.subr.mxu0 0.0
        %775 = vmatpush1.msra.mxu0 0.0
        %776 = vmatprep.subr.mxu0 0.0
        %777 = vmatpush1.msra.mxu0 0.0
        %778 = vmatprep.subr.mxu0 0.0
        %779 = vmatpush1.msra.mxu0 0.0
        %780 = vmatprep.subr.mxu0 0.0
        %781 = vmatpush1.msra.mxu0 0.0
        %782 = vmatprep.subr.mxu0 0.0
        %783 = vmatpush1.msra.mxu0 0.0
        %784 = vmatprep.subr.mxu0 0.0
        %785 = vmatpush1.msra.mxu0 0.0
        %786 = vmatprep.subr.mxu0 0.0
        %787 = vmatpush1.msra.mxu0 0.0
        %788 = vmatprep.subr.mxu0 0.0
        %789 = vmatpush1.msra.mxu0 0.0
        %790 = vmatprep.subr.mxu0 0.0
        %791 = vmatpush1.msra.mxu0 0.0
        %792 = vmatprep.subr.mxu0 0.0
        %793 = vmatpush1.msra.mxu0 0.0
        %794 = vmatprep.subr.mxu0 0.0
        %795 = vmatpush1.msra.mxu0 0.0
        %796 = vmatprep.subr.mxu0 0.0
        %797 = vmatpush1.msra.mxu0 0.0
        %798 = vmatprep.subr.mxu0 0.0
        %799 = vmatpush1.msra.mxu0 0.0
        %800 = vmatprep.subr.mxu0 0.0
        %801 = vmatpush1.msra.mxu0 0.0
        %802 = vmatprep.subr.mxu0 0.0
        %803 = vmatpush1.msra.mxu0 0.0
        %804 = vmatprep.subr.mxu0 0.0
        %805 = vmatpush1.msra.mxu0 0.0
        %806 = vmatprep.subr.mxu0 0.0
        %807 = vmatpush1.msra.mxu0 0.0
        %808 = vmatprep.subr.mxu0 0.0
        %809 = vmatpush1.msra.mxu0 0.0
        %810 = vmatprep.subr.mxu0 0.0
        %811 = vmatpush1.msra.mxu0 0.0
        %812 = vmatprep.subr.mxu0 0.0
        %813 = vmatpush1.msra.mxu0 0.0
        %814 = vmatprep.subr.mxu0 0.0
        %815 = vmatpush1.msra.mxu0 0.0
        %816 = vmatprep.subr.mxu0 0.0
        %817 = vmatpush1.msra.mxu0 0.0
        %818 = vmatprep.subr.mxu0 0.0
        %819 = vmatpush1.msra.mxu0 0.0
        %820 = vmatprep.subr.mxu0 0.0
        %821 = vmatpush1.msra.mxu0 0.0
        %822 = vmatprep.subr.mxu0 0.0
        %823 = vmatpush1.msra.mxu0 0.0
        %824 = vmatprep.subr.mxu0 0.0
        %825 = vmatpush1.msra.mxu0 0.0
        %826 = vmatprep.mubr.f32.mxu0 0.0
        %827 = vmatmul.mubr.f32.gmra.mrb[0].mxu0 %v760
        %v828 = vpop.f32.mrb[0].mxu0
        %v829 = vadd.f32 0.0, %v828
        %v830 = vpop.f32.mrb[0].mxu0
        %831 = vdwg.mxu0
        %v832 = vld [vmem:[%s704] sm:$0xff]
        %v833 = vld [vmem:[%s704 + $0x8] sm:$0xff]
        %v834 = vld [vmem:[%s704 + $0x10] sm:$0xff]
        %v835 = vld [vmem:[%s704 + $0x18] sm:$0xff]
        %836 = vmatprep.subr.mxu0 0.0
        %837 = vmatpush1.msra.mxu0 %v832
        %838 = vmatprep.subr.mxu0 0.0
        %839 = vmatpush1.msra.mxu0 %v833
        %840 = vmatprep.subr.mxu0 0.0
        %841 = vmatpush1.msra.mxu0 %v834
        %842 = vmatprep.subr.mxu0 0.0
        %843 = vmatpush1.msra.mxu0 %v835
        %844 = vmatprep.subr.mxu0 0.0
        %845 = vmatpush1.msra.mxu0 0.0
        %846 = vmatprep.subr.mxu0 0.0
        %847 = vmatpush1.msra.mxu0 0.0
        %848 = vmatprep.subr.mxu0 0.0
        %849 = vmatpush1.msra.mxu0 0.0
        %850 = vmatprep.subr.mxu0 0.0
        %851 = vmatpush1.msra.mxu0 0.0
        %852 = vmatprep.subr.mxu0 0.0
        %853 = vmatpush1.msra.mxu0 0.0
        %854 = vmatprep.subr.mxu0 0.0
        %855 = vmatpush1.msra.mxu0 0.0
        %856 = vmatprep.subr.mxu0 0.0
        %857 = vmatpush1.msra.mxu0 0.0
        %858 = vmatprep.subr.mxu0 0.0
        %859 = vmatpush1.msra.mxu0 0.0
        %860 = vmatprep.subr.mxu0 0.0
        %861 = vmatpush1.msra.mxu0 0.0
        %862 = vmatprep.subr.mxu0 0.0
        %863 = vmatpush1.msra.mxu0 0.0
        %864 = vmatprep.subr.mxu0 0.0
        %865 = vmatpush1.msra.mxu0 0.0
        %866 = vmatprep.subr.mxu0 0.0
        %867 = vmatpush1.msra.mxu0 0.0
        %868 = vmatprep.subr.mxu0 0.0
        %869 = vmatpush1.msra.mxu0 0.0
        %870 = vmatprep.subr.mxu0 0.0
        %871 = vmatpush1.msra.mxu0 0.0
        %872 = vmatprep.subr.mxu0 0.0
        %873 = vmatpush1.msra.mxu0 0.0
        %874 = vmatprep.subr.mxu0 0.0
        %875 = vmatpush1.msra.mxu0 0.0
        %876 = vmatprep.subr.mxu0 0.0
        %877 = vmatpush1.msra.mxu0 0.0
        %878 = vmatprep.subr.mxu0 0.0
        %879 = vmatpush1.msra.mxu0 0.0
        %880 = vmatprep.subr.mxu0 0.0
        %881 = vmatpush1.msra.mxu0 0.0
        %882 = vmatprep.subr.mxu0 0.0
        %883 = vmatpush1.msra.mxu0 0.0
        %884 = vmatprep.subr.mxu0 0.0
        %885 = vmatpush1.msra.mxu0 0.0
        %886 = vmatprep.subr.mxu0 0.0
        %887 = vmatpush1.msra.mxu0 0.0
        %888 = vmatprep.subr.mxu0 0.0
        %889 = vmatpush1.msra.mxu0 0.0
        %890 = vmatprep.subr.mxu0 0.0
        %891 = vmatpush1.msra.mxu0 0.0
        %892 = vmatprep.subr.mxu0 0.0
        %893 = vmatpush1.msra.mxu0 0.0
        %894 = vmatprep.subr.mxu0 0.0
        %895 = vmatpush1.msra.mxu0 0.0
        %896 = vmatprep.subr.mxu0 0.0
        %897 = vmatpush1.msra.mxu0 0.0
        %898 = vmatprep.subr.mxu0 0.0
        %899 = vmatpush1.msra.mxu0 0.0
        %900 = vmatprep.mubr.f32.mxu0 0.0
        %901 = vmatmul.mubr.f32.gmra.mrb[0].mxu0 %v760
        %v902 = vpop.f32.mrb[0].mxu0
        %v903 = vadd.f32 0.0, %v902
        %v904 = vpop.f32.mrb[0].mxu0
        %905 = vdwg.mxu0
        %v906 = vld [vmem:[%s709] sm:$0xff]
        %v907 = vld [vmem:[%s709 + $0x8] sm:$0xff]
        %v908 = vld [vmem:[%s709 + $0x10] sm:$0xff]
        %v909 = vld [vmem:[%s709 + $0x18] sm:$0xff]
        %910 = vmatprep.subr.mxu0 0.0
        %911 = vmatpush1.msra.mxu0 %v906
        %912 = vmatprep.subr.mxu0 0.0
        %913 = vmatpush1.msra.mxu0 %v907
        %914 = vmatprep.subr.mxu0 0.0
        %915 = vmatpush1.msra.mxu0 %v908
        %916 = vmatprep.subr.mxu0 0.0
        %917 = vmatpush1.msra.mxu0 %v909
        %918 = vmatprep.subr.mxu0 0.0
        %919 = vmatpush1.msra.mxu0 0.0
        %920 = vmatprep.subr.mxu0 0.0
        %921 = vmatpush1.msra.mxu0 0.0
        %922 = vmatprep.subr.mxu0 0.0
        %923 = vmatpush1.msra.mxu0 0.0
        %924 = vmatprep.subr.mxu0 0.0
        %925 = vmatpush1.msra.mxu0 0.0
        %926 = vmatprep.subr.mxu0 0.0
        %927 = vmatpush1.msra.mxu0 0.0
        %928 = vmatprep.subr.mxu0 0.0
        %929 = vmatpush1.msra.mxu0 0.0
        %930 = vmatprep.subr.mxu0 0.0
        %931 = vmatpush1.msra.mxu0 0.0
        %932 = vmatprep.subr.mxu0 0.0
        %933 = vmatpush1.msra.mxu0 0.0
        %934 = vmatprep.subr.mxu0 0.0
        %935 = vmatpush1.msra.mxu0 0.0
        %936 = vmatprep.subr.mxu0 0.0
        %937 = vmatpush1.msra.mxu0 0.0
        %938 = vmatprep.subr.mxu0 0.0
        %939 = vmatpush1.msra.mxu0 0.0
        %940 = vmatprep.subr.mxu0 0.0
        %941 = vmatpush1.msra.mxu0 0.0
        %942 = vmatprep.subr.mxu0 0.0
        %943 = vmatpush1.msra.mxu0 0.0
        %944 = vmatprep.subr.mxu0 0.0
        %945 = vmatpush1.msra.mxu0 0.0
        %946 = vmatprep.subr.mxu0 0.0
        %947 = vmatpush1.msra.mxu0 0.0
        %948 = vmatprep.subr.mxu0 0.0
        %949 = vmatpush1.msra.mxu0 0.0
        %950 = vmatprep.subr.mxu0 0.0
        %951 = vmatpush1.msra.mxu0 0.0
        %952 = vmatprep.subr.mxu0 0.0
        %953 = vmatpush1.msra.mxu0 0.0
        %954 = vmatprep.subr.mxu0 0.0
        %955 = vmatpush1.msra.mxu0 0.0
        %956 = vmatprep.subr.mxu0 0.0
        %957 = vmatpush1.msra.mxu0 0.0
        %958 = vmatprep.subr.mxu0 0.0
        %959 = vmatpush1.msra.mxu0 0.0
        %960 = vmatprep.subr.mxu0 0.0
        %961 = vmatpush1.msra.mxu0 0.0
        %962 = vmatprep.subr.mxu0 0.0
        %963 = vmatpush1.msra.mxu0 0.0
        %964 = vmatprep.subr.mxu0 0.0
        %965 = vmatpush1.msra.mxu0 0.0
        %966 = vmatprep.subr.mxu0 0.0
        %967 = vmatpush1.msra.mxu0 0.0
        %968 = vmatprep.subr.mxu0 0.0
        %969 = vmatpush1.msra.mxu0 0.0
        %970 = vmatprep.subr.mxu0 0.0
        %971 = vmatpush1.msra.mxu0 0.0
        %972 = vmatprep.subr.mxu0 0.0
        %973 = vmatpush1.msra.mxu0 0.0
        %974 = vmatprep.mubr.f32.mxu0 0.0
        %975 = vmatmul.mubr.f32.gmra.mrb[0].mxu0 %v760
        %v976 = vpop.f32.mrb[0].mxu0
        %v977 = vadd.f32 0.0, %v976
        %v978 = vpop.f32.mrb[0].mxu0
        %979 = vdwg.mxu0
        %981 = vrot.lane.b32.xlu0 %v829, 96
        %v982 = vpop.permute.xlu0 %981
        %984 = vrot.lane.b32.xlu0 %v903, 96
        %v985 = vpop.permute.xlu0 %984
        %987 = vrot.lane.b32.xlu0 %v977, 96
        %v988 = vpop.permute.xlu0 %987
        %v990 = vsel %vm758, %v829, 0
        %v992 = vsel %vm758, %v903, 0
        %994 = vmatprep.subr.mxu0 0.0
        %995 = vmatpush1.xpose.msra.mxu0 %v992
        %996 = vmatprep.subr.mxu0 0.0
        %997 = vmatpush1.xpose.msra.mxu0 0.0
        %998 = vmatprep.subr.mxu0 0.0
        %999 = vmatpush1.xpose.msra.mxu0 0.0
        %1000 = vmatprep.subr.mxu0 0.0
        %1001 = vmatpush1.xpose.msra.mxu0 0.0
        %1002 = vmatprep.subr.mxu0 0.0
        %1003 = vmatpush1.xpose.msra.mxu0 0.0
        %1004 = vmatprep.subr.mxu0 0.0
        %1005 = vmatpush1.xpose.msra.mxu0 0.0
        %1006 = vmatprep.subr.mxu0 0.0
        %1007 = vmatpush1.xpose.msra.mxu0 0.0
        %1008 = vmatprep.subr.mxu0 0.0
        %1009 = vmatpush1.xpose.msra.mxu0 0.0
        %1010 = vmatprep.subr.mxu0 0.0
        %1011 = vmatpush1.xpose.msra.mxu0 0.0
        %1012 = vmatprep.subr.mxu0 0.0
        %1013 = vmatpush1.xpose.msra.mxu0 0.0
        %1014 = vmatprep.subr.mxu0 0.0
        %1015 = vmatpush1.xpose.msra.mxu0 0.0
        %1016 = vmatprep.subr.mxu0 0.0
        %1017 = vmatpush1.xpose.msra.mxu0 0.0
        %1018 = vmatprep.subr.mxu0 0.0
        %1019 = vmatpush1.xpose.msra.mxu0 0.0
        %1020 = vmatprep.subr.mxu0 0.0
        %1021 = vmatpush1.xpose.msra.mxu0 0.0
        %1022 = vmatprep.subr.mxu0 0.0
        %1023 = vmatpush1.xpose.msra.mxu0 0.0
        %1024 = vmatprep.subr.mxu0 0.0
        %1025 = vmatpush1.xpose.msra.mxu0 0.0
        %1026 = vmatprep.subr.mxu0 0.0
        %1027 = vmatpush1.xpose.msra.mxu0 0.0
        %1028 = vmatprep.subr.mxu0 0.0
        %1029 = vmatpush1.xpose.msra.mxu0 0.0
        %1030 = vmatprep.subr.mxu0 0.0
        %1031 = vmatpush1.xpose.msra.mxu0 0.0
        %1032 = vmatprep.subr.mxu0 0.0
        %1033 = vmatpush1.xpose.msra.mxu0 0.0
        %1034 = vmatprep.subr.mxu0 0.0
        %1035 = vmatpush1.xpose.msra.mxu0 0.0
        %1036 = vmatprep.subr.mxu0 0.0
        %1037 = vmatpush1.xpose.msra.mxu0 0.0
        %1038 = vmatprep.subr.mxu0 0.0
        %1039 = vmatpush1.xpose.msra.mxu0 0.0
        %1040 = vmatprep.subr.mxu0 0.0
        %1041 = vmatpush1.xpose.msra.mxu0 0.0
        %1042 = vmatprep.subr.mxu0 0.0
        %1043 = vmatpush1.xpose.msra.mxu0 0.0
        %1044 = vmatprep.subr.mxu0 0.0
        %1045 = vmatpush1.xpose.msra.mxu0 0.0
        %1046 = vmatprep.subr.mxu0 0.0
        %1047 = vmatpush1.xpose.msra.mxu0 0.0
        %1048 = vmatprep.subr.mxu0 0.0
        %1049 = vmatpush1.xpose.msra.mxu0 0.0
        %1050 = vmatprep.subr.mxu0 0.0
        %1051 = vmatpush1.xpose.msra.mxu0 0.0
        %1052 = vmatprep.subr.mxu0 0.0
        %1053 = vmatpush1.xpose.msra.mxu0 0.0
        %1054 = vmatprep.subr.mxu0 0.0
        %1055 = vmatpush1.xpose.msra.mxu0 0.0
        %1056 = vmatprep.subr.mxu0 0.0
        %1057 = vmatpush1.xpose.msra.mxu0 0.0
        %1058 = vmatprep.mubr.f32.mxu0 0.0
        %1059 = vmatmul.mubr.f32.gmra.mrb[0].mxu0 %v990
        %v1060 = vpop.f32.mrb[0].mxu0
        %v1061 = vadd.f32 0.0, %v1060
        %v1062 = vpop.f32.mrb[0].mxu0
        %1063 = vdwg.mxu0
        %v1064 = vsel %vm758, %v982, 0
        %v1066 = vsel %vm758, %v985, 0
        %1068 = vmatprep.subr.mxu0 0.0
        %1069 = vmatpush1.xpose.msra.mxu0 %v1066
        %1070 = vmatprep.subr.mxu0 0.0
        %1071 = vmatpush1.xpose.msra.mxu0 0.0
        %1072 = vmatprep.subr.mxu0 0.0
        %1073 = vmatpush1.xpose.msra.mxu0 0.0
        %1074 = vmatprep.subr.mxu0 0.0
        %1075 = vmatpush1.xpose.msra.mxu0 0.0
        %1076 = vmatprep.subr.mxu0 0.0
        %1077 = vmatpush1.xpose.msra.mxu0 0.0
        %1078 = vmatprep.subr.mxu0 0.0
        %1079 = vmatpush1.xpose.msra.mxu0 0.0
        %1080 = vmatprep.subr.mxu0 0.0
        %1081 = vmatpush1.xpose.msra.mxu0 0.0
        %1082 = vmatprep.subr.mxu0 0.0
        %1083 = vmatpush1.xpose.msra.mxu0 0.0
        %1084 = vmatprep.subr.mxu0 0.0
        %1085 = vmatpush1.xpose.msra.mxu0 0.0
        %1086 = vmatprep.subr.mxu0 0.0
        %1087 = vmatpush1.xpose.msra.mxu0 0.0
        %1088 = vmatprep.subr.mxu0 0.0
        %1089 = vmatpush1.xpose.msra.mxu0 0.0
        %1090 = vmatprep.subr.mxu0 0.0
        %1091 = vmatpush1.xpose.msra.mxu0 0.0
        %1092 = vmatprep.subr.mxu0 0.0
        %1093 = vmatpush1.xpose.msra.mxu0 0.0
        %1094 = vmatprep.subr.mxu0 0.0
        %1095 = vmatpush1.xpose.msra.mxu0 0.0
        %1096 = vmatprep.subr.mxu0 0.0
        %1097 = vmatpush1.xpose.msra.mxu0 0.0
        %1098 = vmatprep.subr.mxu0 0.0
        %1099 = vmatpush1.xpose.msra.mxu0 0.0
        %1100 = vmatprep.subr.mxu0 0.0
        %1101 = vmatpush1.xpose.msra.mxu0 0.0
        %1102 = vmatprep.subr.mxu0 0.0
        %1103 = vmatpush1.xpose.msra.mxu0 0.0
        %1104 = vmatprep.subr.mxu0 0.0
        %1105 = vmatpush1.xpose.msra.mxu0 0.0
        %1106 = vmatprep.subr.mxu0 0.0
        %1107 = vmatpush1.xpose.msra.mxu0 0.0
        %1108 = vmatprep.subr.mxu0 0.0
        %1109 = vmatpush1.xpose.msra.mxu0 0.0
        %1110 = vmatprep.subr.mxu0 0.0
        %1111 = vmatpush1.xpose.msra.mxu0 0.0
        %1112 = vmatprep.subr.mxu0 0.0
        %1113 = vmatpush1.xpose.msra.mxu0 0.0
        %1114 = vmatprep.subr.mxu0 0.0
        %1115 = vmatpush1.xpose.msra.mxu0 0.0
        %1116 = vmatprep.subr.mxu0 0.0
        %1117 = vmatpush1.xpose.msra.mxu0 0.0
        %1118 = vmatprep.subr.mxu0 0.0
        %1119 = vmatpush1.xpose.msra.mxu0 0.0
        %1120 = vmatprep.subr.mxu0 0.0
        %1121 = vmatpush1.xpose.msra.mxu0 0.0
        %1122 = vmatprep.subr.mxu0 0.0
        %1123 = vmatpush1.xpose.msra.mxu0 0.0
        %1124 = vmatprep.subr.mxu0 0.0
        %1125 = vmatpush1.xpose.msra.mxu0 0.0
        %1126 = vmatprep.subr.mxu0 0.0
        %1127 = vmatpush1.xpose.msra.mxu0 0.0
        %1128 = vmatprep.subr.mxu0 0.0
        %1129 = vmatpush1.xpose.msra.mxu0 0.0
        %1130 = vmatprep.subr.mxu0 0.0
        %1131 = vmatpush1.xpose.msra.mxu0 0.0
        %1132 = vmatprep.mubr.f32.mxu0 0.0
        %1133 = vmatmul.mubr.f32.gmra.mrb[0].mxu0 %v1064
        %v1134 = vpop.f32.mrb[0].mxu0
        %v1135 = vadd.f32 0.0, %v1134
        %v1136 = vpop.f32.mrb[0].mxu0
        %1137 = vdwg.mxu0
        %vm1138 = vcmask 64512
        %v1139 = vsel %vm1138, %v1061, -inf
        %1140 = vmax.xlane.f32.xlu0 %v1139
        %v1141 = vpop.xlane.xlu0 %1140
        %v1142 = vsel %vm1138, %v1135, -inf
        %1143 = vmax.xlane.f32.xlu0 %v1142
        %v1144 = vpop.xlane.xlu0 %1143
        %v1145 = vsub.f32 %v1061, %v1141
        %v1146 = vsub.f32 %v1135, %v1144
        %v1147 = vmul.f32 %v1145, 1.442695
        %v1148 = vpow.pop %v1147
        %v1149 = vmul.f32 %v1146, 1.442695
        %v1150 = vpow.pop %v1149
        %v1151 = vsel %vm1138, %v1148, 0.0
        %1152 = vadd.xlane.f32.xlu0 %v1151
        %v1153 = vpop.xlane.xlu0 %1152
        %v1154 = vsel %vm1138, %v1150, 0.0
        %1155 = vadd.xlane.f32.xlu0 %v1154
        %v1156 = vpop.xlane.xlu0 %1155
        %v1157 = vrcp.pop %v1153
        %v1158 = vmul.f32 %v1148, %v1157
        %v1159 = vrcp.pop %v1156
        %v1160 = vmul.f32 %v1150, %v1159
        %v1162 = vsel %vm1138, %v1158, 0
        %1164 = vmatprep.subr.mxu0 0.0
        %1165 = vmatpush1.msra.mxu0 %v977
        %1166 = vmatprep.subr.mxu0 0.0
        %1167 = vmatpush1.msra.mxu0 0.0
        %1168 = vmatprep.subr.mxu0 0.0
        %1169 = vmatpush1.msra.mxu0 0.0
        %1170 = vmatprep.subr.mxu0 0.0
        %1171 = vmatpush1.msra.mxu0 0.0
        %1172 = vmatprep.subr.mxu0 0.0
        %1173 = vmatpush1.msra.mxu0 0.0
        %1174 = vmatprep.subr.mxu0 0.0
        %1175 = vmatpush1.msra.mxu0 0.0
        %1176 = vmatprep.subr.mxu0 0.0
        %1177 = vmatpush1.msra.mxu0 0.0
        %1178 = vmatprep.subr.mxu0 0.0
        %1179 = vmatpush1.msra.mxu0 0.0
        %1180 = vmatprep.subr.mxu0 0.0
        %1181 = vmatpush1.msra.mxu0 0.0
        %1182 = vmatprep.subr.mxu0 0.0
        %1183 = vmatpush1.msra.mxu0 0.0
        %1184 = vmatprep.subr.mxu0 0.0
        %1185 = vmatpush1.msra.mxu0 0.0
        %1186 = vmatprep.subr.mxu0 0.0
        %1187 = vmatpush1.msra.mxu0 0.0
        %1188 = vmatprep.subr.mxu0 0.0
        %1189 = vmatpush1.msra.mxu0 0.0
        %1190 = vmatprep.subr.mxu0 0.0
        %1191 = vmatpush1.msra.mxu0 0.0
        %1192 = vmatprep.subr.mxu0 0.0
        %1193 = vmatpush1.msra.mxu0 0.0
        %1194 = vmatprep.subr.mxu0 0.0
        %1195 = vmatpush1.msra.mxu0 0.0
        %1196 = vmatprep.subr.mxu0 0.0
        %1197 = vmatpush1.msra.mxu0 0.0
        %1198 = vmatprep.subr.mxu0 0.0
        %1199 = vmatpush1.msra.mxu0 0.0
        %1200 = vmatprep.subr.mxu0 0.0
        %1201 = vmatpush1.msra.mxu0 0.0
        %1202 = vmatprep.subr.mxu0 0.0
        %1203 = vmatpush1.msra.mxu0 0.0
        %1204 = vmatprep.subr.mxu0 0.0
        %1205 = vmatpush1.msra.mxu0 0.0
        %1206 = vmatprep.subr.mxu0 0.0
        %1207 = vmatpush1.msra.mxu0 0.0
        %1208 = vmatprep.subr.mxu0 0.0
        %1209 = vmatpush1.msra.mxu0 0.0
        %1210 = vmatprep.subr.mxu0 0.0
        %1211 = vmatpush1.msra.mxu0 0.0
        %1212 = vmatprep.subr.mxu0 0.0
        %1213 = vmatpush1.msra.mxu0 0.0
        %1214 = vmatprep.subr.mxu0 0.0
        %1215 = vmatpush1.msra.mxu0 0.0
        %1216 = vmatprep.subr.mxu0 0.0
        %1217 = vmatpush1.msra.mxu0 0.0
        %1218 = vmatprep.subr.mxu0 0.0
        %1219 = vmatpush1.msra.mxu0 0.0
        %1220 = vmatprep.subr.mxu0 0.0
        %1221 = vmatpush1.msra.mxu0 0.0
        %1222 = vmatprep.subr.mxu0 0.0
        %1223 = vmatpush1.msra.mxu0 0.0
        %1224 = vmatprep.subr.mxu0 0.0
        %1225 = vmatpush1.msra.mxu0 0.0
        %1226 = vmatprep.subr.mxu0 0.0
        %1227 = vmatpush1.msra.mxu0 0.0
        %1228 = vmatprep.mubr.f32.mxu0 0.0
        %1229 = vmatmul.mubr.f32.gmra.mrb[0].mxu0 %v1162
        %v1230 = vpop.f32.mrb[0].mxu0
        %v1231 = vadd.f32 0.0, %v1230
        %v1232 = vpop.f32.mrb[0].mxu0
        %1233 = vdwg.mxu0
        %v1235 = vsel %vm1138, %v1160, 0
        %1237 = vmatprep.subr.mxu0 0.0
        %1238 = vmatpush1.msra.mxu0 %v988
        %1239 = vmatprep.subr.mxu0 0.0
        %1240 = vmatpush1.msra.mxu0 0.0
        %1241 = vmatprep.subr.mxu0 0.0
        %1242 = vmatpush1.msra.mxu0 0.0
        %1243 = vmatprep.subr.mxu0 0.0
        %1244 = vmatpush1.msra.mxu0 0.0
        %1245 = vmatprep.subr.mxu0 0.0
        %1246 = vmatpush1.msra.mxu0 0.0
        %1247 = vmatprep.subr.mxu0 0.0
        %1248 = vmatpush1.msra.mxu0 0.0
        %1249 = vmatprep.subr.mxu0 0.0
        %1250 = vmatpush1.msra.mxu0 0.0
        %1251 = vmatprep.subr.mxu0 0.0
        %1252 = vmatpush1.msra.mxu0 0.0
        %1253 = vmatprep.subr.mxu0 0.0
        %1254 = vmatpush1.msra.mxu0 0.0
        %1255 = vmatprep.subr.mxu0 0.0
        %1256 = vmatpush1.msra.mxu0 0.0
        %1257 = vmatprep.subr.mxu0 0.0
        %1258 = vmatpush1.msra.mxu0 0.0
        %1259 = vmatprep.subr.mxu0 0.0
        %1260 = vmatpush1.msra.mxu0 0.0
        %1261 = vmatprep.subr.mxu0 0.0
        %1262 = vmatpush1.msra.mxu0 0.0
        %1263 = vmatprep.subr.mxu0 0.0
        %1264 = vmatpush1.msra.mxu0 0.0
        %1265 = vmatprep.subr.mxu0 0.0
        %1266 = vmatpush1.msra.mxu0 0.0
        %1267 = vmatprep.subr.mxu0 0.0
        %1268 = vmatpush1.msra.mxu0 0.0
        %1269 = vmatprep.subr.mxu0 0.0
        %1270 = vmatpush1.msra.mxu0 0.0
        %1271 = vmatprep.subr.mxu0 0.0
        %1272 = vmatpush1.msra.mxu0 0.0
        %1273 = vmatprep.subr.mxu0 0.0
        %1274 = vmatpush1.msra.mxu0 0.0
        %1275 = vmatprep.subr.mxu0 0.0
        %1276 = vmatpush1.msra.mxu0 0.0
        %1277 = vmatprep.subr.mxu0 0.0
        %1278 = vmatpush1.msra.mxu0 0.0
        %1279 = vmatprep.subr.mxu0 0.0
        %1280 = vmatpush1.msra.mxu0 0.0
        %1281 = vmatprep.subr.mxu0 0.0
        %1282 = vmatpush1.msra.mxu0 0.0
        %1283 = vmatprep.subr.mxu0 0.0
        %1284 = vmatpush1.msra.mxu0 0.0
        %1285 = vmatprep.subr.mxu0 0.0
        %1286 = vmatpush1.msra.mxu0 0.0
        %1287 = vmatprep.subr.mxu0 0.0
        %1288 = vmatpush1.msra.mxu0 0.0
        %1289 = vmatprep.subr.mxu0 0.0
        %1290 = vmatpush1.msra.mxu0 0.0
        %1291 = vmatprep.subr.mxu0 0.0
        %1292 = vmatpush1.msra.mxu0 0.0
        %1293 = vmatprep.subr.mxu0 0.0
        %1294 = vmatpush1.msra.mxu0 0.0
        %1295 = vmatprep.subr.mxu0 0.0
        %1296 = vmatpush1.msra.mxu0 0.0
        %1297 = vmatprep.subr.mxu0 0.0
        %1298 = vmatpush1.msra.mxu0 0.0
        %1299 = vmatprep.subr.mxu0 0.0
        %1300 = vmatpush1.msra.mxu0 0.0
        %1301 = vmatprep.mubr.f32.mxu0 0.0
        %1302 = vmatmul.mubr.f32.gmra.mrb[0].mxu0 %v1235
        %v1303 = vpop.f32.mrb[0].mxu0
        %v1304 = vadd.f32 0.0, %v1303
        %v1305 = vpop.f32.mrb[0].mxu0
        %1306 = vdwg.mxu0
        %1308 = vrot.lane.b32.xlu0 %v1304, 32
        %v1309 = vpop.permute.xlu0 %1308
        %v1311 = vsel %vm758, %v1231, %v1309
        %v1312 = vld [vmem:[%s714] sm:$0xff]
        %v1313 = vld [vmem:[%s714 + $0x8] sm:$0xff]
        %v1314 = vld [vmem:[%s714 + $0x10] sm:$0xff]
        %v1315 = vld [vmem:[%s714 + $0x18] sm:$0xff]
        %v1316 = vld [vmem:[%s714 + $0x20] sm:$0xff]
        %v1317 = vld [vmem:[%s714 + $0x28] sm:$0xff]
        %v1318 = vld [vmem:[%s714 + $0x30] sm:$0xff]
        %v1319 = vld [vmem:[%s714 + $0x38] sm:$0xff]
        %v1320 = vld [vmem:[%s717] sm:$0x1]
        %v1322 = vlaneseq
        %v1323 = vshrl.u32 %v1322, 7
        %v1324 = vsub.s32 0, %v1323
        %v1325 = vrot.slane %v1320, %v1324
        %vm1327 = vcmask 523264
        %v1329 = vsel %vm1327, %v1311, 0
        %1331 = vmatprep.subr.mxu0 0.0
        %1332 = vmatpush1.msra.mxu0 %v1312
        %1333 = vmatprep.subr.mxu0 0.0
        %1334 = vmatpush1.msra.mxu0 %v1313
        %1335 = vmatprep.subr.mxu0 0.0
        %1336 = vmatpush1.msra.mxu0 %v1314
        %1337 = vmatprep.subr.mxu0 0.0
        %1338 = vmatpush1.msra.mxu0 %v1315
        %1339 = vmatprep.subr.mxu0 0.0
        %1340 = vmatpush1.msra.mxu0 %v1316
        %1341 = vmatprep.subr.mxu0 0.0
        %1342 = vmatpush1.msra.mxu0 %v1317
        %1343 = vmatprep.subr.mxu0 0.0
        %1344 = vmatpush1.msra.mxu0 %v1318
        %1345 = vmatprep.subr.mxu0 0.0
        %1346 = vmatpush1.msra.mxu0 %v1319
        %1347 = vmatprep.subr.mxu0 0.0
        %1348 = vmatpush1.msra.mxu0 0.0
        %1349 = vmatprep.subr.mxu0 0.0
        %1350 = vmatpush1.msra.mxu0 0.0
        %1351 = vmatprep.subr.mxu0 0.0
        %1352 = vmatpush1.msra.mxu0 0.0
        %1353 = vmatprep.subr.mxu0 0.0
        %1354 = vmatpush1.msra.mxu0 0.0
        %1355 = vmatprep.subr.mxu0 0.0
        %1356 = vmatpush1.msra.mxu0 0.0
        %1357 = vmatprep.subr.mxu0 0.0
        %1358 = vmatpush1.msra.mxu0 0.0
        %1359 = vmatprep.subr.mxu0 0.0
        %1360 = vmatpush1.msra.mxu0 0.0
        %1361 = vmatprep.subr.mxu0 0.0
        %1362 = vmatpush1.msra.mxu0 0.0
        %1363 = vmatprep.subr.mxu0 0.0
        %1364 = vmatpush1.msra.mxu0 0.0
        %1365 = vmatprep.subr.mxu0 0.0
        %1366 = vmatpush1.msra.mxu0 0.0
        %1367 = vmatprep.subr.mxu0 0.0
        %1368 = vmatpush1.msra.mxu0 0.0
        %1369 = vmatprep.subr.mxu0 0.0
        %1370 = vmatpush1.msra.mxu0 0.0
        %1371 = vmatprep.subr.mxu0 0.0
        %1372 = vmatpush1.msra.mxu0 0.0
        %1373 = vmatprep.subr.mxu0 0.0
        %1374 = vmatpush1.msra.mxu0 0.0
        %1375 = vmatprep.subr.mxu0 0.0
        %1376 = vmatpush1.msra.mxu0 0.0
        %1377 = vmatprep.subr.mxu0 0.0
        %1378 = vmatpush1.msra.mxu0 0.0
        %1379 = vmatprep.subr.mxu0 0.0
        %1380 = vmatpush1.msra.mxu0 0.0
        %1381 = vmatprep.subr.mxu0 0.0
        %1382 = vmatpush1.msra.mxu0 0.0
        %1383 = vmatprep.subr.mxu0 0.0
        %1384 = vmatpush1.msra.mxu0 0.0
        %1385 = vmatprep.subr.mxu0 0.0
        %1386 = vmatpush1.msra.mxu0 0.0
        %1387 = vmatprep.subr.mxu0 0.0
        %1388 = vmatpush1.msra.mxu0 0.0
        %1389 = vmatprep.subr.mxu0 0.0
        %1390 = vmatpush1.msra.mxu0 0.0
        %1391 = vmatprep.subr.mxu0 0.0
        %1392 = vmatpush1.msra.mxu0 0.0
        %1393 = vmatprep.subr.mxu0 0.0
        %1394 = vmatpush1.msra.mxu0 0.0
        %1395 = vmatprep.mubr.f32.mxu0 0.0
        %1396 = vmatmul.mubr.f32.gmra.mrb[0].mxu0 %v1329
        %v1397 = vpop.f32.mrb[0].mxu0
        %v1398 = vadd.f32 %v1325, %v1397
        %v1399 = vpop.f32.mrb[0].mxu0
        %1400 = vdwg.mxu0
        %v1401 = vadd.f32 %v1398, %v753
        %v1402 = vsel %vm758, %v1401, 0.0
        %1403 = vadd.xlane.f32.xlu0 %v1402
        %v1404 = vpop.xlane.xlu0 %1403
        %v1405 = vrcp.pop 32.0
        %v1406 = vmul.f32 %v1404, %v1405
        %v1407 = vsub.f32 %v1401, %v1406
        %v1408 = vmul.f32 %v1407, %v1407
        %v1409 = vsel %vm758, %v1408, 0.0
        %1410 = vadd.xlane.f32.xlu0 %v1409
        %v1411 = vpop.xlane.xlu0 %1410
        %v1412 = vmul.f32 %v1411, %v1405
        %v1413 = vadd.f32 %v1412, 1e-05
        %v1414 = vrsqrt.pop %v1413
        %v1415 = vmul.f32 %v1407, %v1414
        %v1416 = vld [vmem:[%s720] sm:$0x1]
        %v1418 = vlaneseq
        %v1419 = vshrl.u32 %v1418, 7
        %v1420 = vsub.s32 0, %v1419
        %v1421 = vrot.slane %v1416, %v1420
        %v1423 = vmul.f32 %v1415, %v1421
        %v1424 = vld [vmem:[%s723] sm:$0x1]
        %v1426 = vlaneseq
        %v1427 = vshrl.u32 %v1426, 7
        %v1428 = vsub.s32 0, %v1427
        %v1429 = vrot.slane %v1424, %v1428
        %v1431 = vadd.f32 %v1423, %v1429
        %v1432 = vld [vmem:[%s728] sm:$0xff]
        %v1433 = vld [vmem:[%s728 + $0x8] sm:$0xff]
        %v1434 = vld [vmem:[%s728 + $0x10] sm:$0xff]
        %v1435 = vld [vmem:[%s728 + $0x18] sm:$0xff]
        %v1436 = vld [vmem:[%s731] sm:$0x1]
        %v1438 = vlaneseq
        %v1439 = vshrl.u32 %v1438, 7
        %v1440 = vsub.s32 0, %v1439
        %v1441 = vrot.slane %v1436, %v1440
        %v1444 = vsel %vm758, %v1431, 0
        %1446 = vmatprep.subr.mxu0 0.0
        %1447 = vmatpush1.msra.mxu0 %v1432
        %1448 = vmatprep.subr.mxu0 0.0
        %1449 = vmatpush1.msra.mxu0 %v1433
        %1450 = vmatprep.subr.mxu0 0.0
        %1451 = vmatpush1.msra.mxu0 %v1434
        %1452 = vmatprep.subr.mxu0 0.0
        %1453 = vmatpush1.msra.mxu0 %v1435
        %1454 = vmatprep.subr.mxu0 0.0
        %1455 = vmatpush1.msra.mxu0 0.0
        %1456 = vmatprep.subr.mxu0 0.0
        %1457 = vmatpush1.msra.mxu0 0.0
        %1458 = vmatprep.subr.mxu0 0.0
        %1459 = vmatpush1.msra.mxu0 0.0
        %1460 = vmatprep.subr.mxu0 0.0
        %1461 = vmatpush1.msra.mxu0 0.0
        %1462 = vmatprep.subr.mxu0 0.0
        %1463 = vmatpush1.msra.mxu0 0.0
        %1464 = vmatprep.subr.mxu0 0.0
        %1465 = vmatpush1.msra.mxu0 0.0
        %1466 = vmatprep.subr.mxu0 0.0
        %1467 = vmatpush1.msra.mxu0 0.0
        %1468 = vmatprep.subr.mxu0 0.0
        %1469 = vmatpush1.msra.mxu0 0.0
        %1470 = vmatprep.subr.mxu0 0.0
        %1471 = vmatpush1.msra.mxu0 0.0
        %1472 = vmatprep.subr.mxu0 0.0
        %1473 = vmatpush1.msra.mxu0 0.0
        %1474 = vmatprep.subr.mxu0 0.0
        %1475 = vmatpush1.msra.mxu0 0.0
        %1476 = vmatprep.subr.mxu0 0.0
        %1477 = vmatpush1.msra.mxu0 0.0
        %1478 = vmatprep.subr.mxu0 0.0
        %1479 = vmatpush1.msra.mxu0 0.0
        %1480 = vmatprep.subr.mxu0 0.0
        %1481 = vmatpush1.msra.mxu0 0.0
        %1482 = vmatprep.subr.mxu0 0.0
        %1483 = vmatpush1.msra.mxu0 0.0
        %1484 = vmatprep.subr.mxu0 0.0
        %1485 = vmatpush1.msra.mxu0 0.0
        %1486 = vmatprep.subr.mxu0 0.0
        %1487 = vmatpush1.msra.mxu0 0.0
        %1488 = vmatprep.subr.mxu0 0.0
        %1489 = vmatpush1.msra.mxu0 0.0
        %1490 = vmatprep.subr.mxu0 0.0
        %1491 = vmatpush1.msra.mxu0 0.0
        %1492 = vmatprep.subr.mxu0 0.0
        %1493 = vmatpush1.msra.mxu0 0.0
        %1494 = vmatprep.subr.mxu0 0.0
        %1495 = vmatpush1.msra.mxu0 0.0
        %1496 = vmatprep.subr.mxu0 0.0
        %1497 = vmatpush1.msra.mxu0 0.0
        %1498 = vmatprep.subr.mxu0 0.0
        %1499 = vmatpush1.msra.mxu0 0.0
        %1500 = vmatprep.subr.mxu0 0.0
        %1501 = vmatpush1.msra.mxu0 0.0
        %1502 = vmatprep.subr.mxu0 0.0
        %1503 = vmatpush1.msra.mxu0 0.0
        %1504 = vmatprep.subr.mxu0 0.0
        %1505 = vmatpush1.msra.mxu0 0.0
        %1506 = vmatprep.subr.mxu0 0.0
        %1507 = vmatpush1.msra.mxu0 0.0
        %1508 = vmatprep.subr.mxu0 0.0
        %1509 = vmatpush1.msra.mxu0 0.0
        %1510 = vmatprep.mubr.f32.mxu0 0.0
        %1511 = vmatmul.mubr.f32.gmra.mrb[0].mxu0 %v1444
        %v1512 = vpop.f32.mrb[0].mxu0
        %v1513 = vadd.f32 %v1441, %v1512
        %v1514 = vpop.f32.mrb[0].mxu0
        %1515 = vdwg.mxu0
        %v1516 = vmax.f32 %v1513, 0.0
        %v1517 = vld [vmem:[%s736] sm:$0xff]
        %v1518 = vld [vmem:[%s736 + $0x8] sm:$0xff]
        %v1519 = vld [vmem:[%s736 + $0x10] sm:$0xff]
        %v1520 = vld [vmem:[%s736 + $0x18] sm:$0xff]
        %v1521 = vld [vmem:[%s736 + $0x20] sm:$0xff]
        %v1522 = vld [vmem:[%s736 + $0x28] sm:$0xff]
        %v1523 = vld [vmem:[%s736 + $0x30] sm:$0xff]
        %v1524 = vld [vmem:[%s736 + $0x38] sm:$0xff]
        %v1525 = vld [vmem:[%s736 + $0x40] sm:$0xff]
        %v1526 = vld [vmem:[%s736 + $0x48] sm:$0xff]
        %v1527 = vld [vmem:[%s736 + $0x50] sm:$0xff]
        %v1528 = vld [vmem:[%s736 + $0x58] sm:$0xff]
        %v1529 = vld [vmem:[%s736 + $0x60] sm:$0xff]
        %v1530 = vld [vmem:[%s736 + $0x68] sm:$0xff]
        %v1531 = vld [vmem:[%s736 + $0x70] sm:$0xff]
        %v1532 = vld [vmem:[%s736 + $0x78] sm:$0xff]
        %v1533 = vld [vmem:[%s739] sm:$0x1]
        %v1535 = vlaneseq
        %v1536 = vshrl.u32 %v1535, 7
        %v1537 = vsub.s32 0, %v1536
        %v1538 = vrot.slane %v1533, %v1537
        %1540 = vmatprep.subr.mxu0 0.0
        %1541 = vmatpush1.msra.mxu0 %v1517
        %1542 = vmatprep.subr.mxu0 0.0
        %1543 = vmatpush1.msra.mxu0 %v1518
        %1544 = vmatprep.subr.mxu0 0.0
        %1545 = vmatpush1.msra.mxu0 %v1519
        %1546 = vmatprep.subr.mxu0 0.0
        %1547 = vmatpush1.msra.mxu0 %v1520
        %1548 = vmatprep.subr.mxu0 0.0
        %1549 = vmatpush1.msra.mxu0 %v1521
        %1550 = vmatprep.subr.mxu0 0.0
        %1551 = vmatpush1.msra.mxu0 %v1522
        %1552 = vmatprep.subr.mxu0 0.0
        %1553 = vmatpush1.msra.mxu0 %v1523
        %1554 = vmatprep.subr.mxu0 0.0
        %1555 = vmatpush1.msra.mxu0 %v1524
        %1556 = vmatprep.subr.mxu0 0.0
        %1557 = vmatpush1.msra.mxu0 %v1525
        %1558 = vmatprep.subr.mxu0 0.0
        %1559 = vmatpush1.msra.mxu0 %v1526
        %1560 = vmatprep.subr.mxu0 0.0
        %1561 = vmatpush1.msra.mxu0 %v1527
        %1562 = vmatprep.subr.mxu0 0.0
        %1563 = vmatpush1.msra.mxu0 %v1528
        %1564 = vmatprep.subr.mxu0 0.0
        %1565 = vmatpush1.msra.mxu0 %v1529
        %1566 = vmatprep.subr.mxu0 0.0
        %1567 = vmatpush1.msra.mxu0 %v1530
        %1568 = vmatprep.subr.mxu0 0.0
        %1569 = vmatpush1.msra.mxu0 %v1531
        %1570 = vmatprep.subr.mxu0 0.0
        %1571 = vmatpush1.msra.mxu0 %v1532
        %1572 = vmatprep.subr.mxu0 0.0
        %1573 = vmatpush1.msra.mxu0 0.0
        %1574 = vmatprep.subr.mxu0 0.0
        %1575 = vmatpush1.msra.mxu0 0.0
        %1576 = vmatprep.subr.mxu0 0.0
        %1577 = vmatpush1.msra.mxu0 0.0
        %1578 = vmatprep.subr.mxu0 0.0
        %1579 = vmatpush1.msra.mxu0 0.0
        %1580 = vmatprep.subr.mxu0 0.0
        %1581 = vmatpush1.msra.mxu0 0.0
        %1582 = vmatprep.subr.mxu0 0.0
        %1583 = vmatpush1.msra.mxu0 0.0
        %1584 = vmatprep.subr.mxu0 0.0
        %1585 = vmatpush1.msra.mxu0 0.0
        %1586 = vmatprep.subr.mxu0 0.0
        %1587 = vmatpush1.msra.mxu0 0.0
        %1588 = vmatprep.subr.mxu0 0.0
        %1589 = vmatpush1.msra.mxu0 0.0
        %1590 = vmatprep.subr.mxu0 0.0
        %1591 = vmatpush1.msra.mxu0 0.0
        %1592 = vmatprep.subr.mxu0 0.0
        %1593 = vmatpush1.msra.mxu0 0.0
        %1594 = vmatprep.subr.mxu0 0.0
        %1595 = vmatpush1.msra.mxu0 0.0
        %1596 = vmatprep.subr.mxu0 0.0
        %1597 = vmatpush1.msra.mxu0 0.0
        %1598 = vmatprep.subr.mxu0 0.0
        %1599 = vmatpush1.msra.mxu0 0.0
        %1600 = vmatprep.subr.mxu0 0.0
        %1601 = vmatpush1.msra.mxu0 0.0
        %1602 = vmatprep.subr.mxu0 0.0
        %1603 = vmatpush1.msra.mxu0 0.0
        %1604 = vmatprep.mubr.f32.mxu0 0.0
        %1605 = vmatmul.mubr.f32.gmra.mrb[0].mxu0 %v1516
        %v1606 = vpop.f32.mrb[0].mxu0
        %v1607 = vadd.f32 %v1538, %v1606
        %v1608 = vpop.f32.mrb[0].mxu0
        %1609 = vdwg.mxu0
        %v1610 = vadd.f32 %v1607, %v1431
        %v1611 = vsel %vm758, %v1610, 0.0
        %1612 = vadd.xlane.f32.xlu0 %v1611
        %v1613 = vpop.xlane.xlu0 %1612
        %v1614 = vmul.f32 %v1613, %v1405
        %v1615 = vsub.f32 %v1610, %v1614
        %v1616 = vmul.f32 %v1615, %v1615
        %v1617 = vsel %vm758, %v1616, 0.0
        %1618 = vadd.xlane.f32.xlu0 %v1617
        %v1619 = vpop.xlane.xlu0 %1618
        %v1620 = vmul.f32 %v1619, %v1405
        %v1621 = vadd.f32 %v1620, 1e-05
        %v1622 = vrsqrt.pop %v1621
        %v1623 = vmul.f32 %v1615, %v1622
        %v1624 = vld [vmem:[%s742] sm:$0x1]
        %v1626 = vlaneseq
        %v1627 = vshrl.u32 %v1626, 7
        %v1628 = vsub.s32 0, %v1627
        %v1629 = vrot.slane %v1624, %v1628
        %v1631 = vmul.f32 %v1623, %v1629
        %v1632 = vld [vmem:[%s745] sm:$0x1]
        %v1634 = vlaneseq
        %v1635 = vshrl.u32 %v1634, 7
        %v1636 = vsub.s32 0, %v1635
        %v1637 = vrot.slane %v1632, %v1636
        %v1639 = vadd.f32 %v1631, %v1637
        %1640 = vst.msk [vmem:[#allocation2] sm:$0xff] %vm758, %v1639
        %p1641 = scmp.eq.s32.totalorder %s35, 1
        // Predicated region
        $region89: #{tpu_custom_call.1} parent=83 // pred_check
          %p1642 = pneg %p1641
        $region90: #{tpu_custom_call.1} parent=83 // pred_check_branch
          %1644 = sbr.rel (%p1642) target = $region92
        $region91: #{tpu_custom_call.1} parent=83 // pred_region
          %v1645 = vsel %vm758, %v1639, -inf
          %v1646 = vrot.slane %v1645, 4
          %v1647 = vmax.f32 %v1645, %v1646
          %v1648 = vrot.slane %v1647, 2
          %v1649 = vmax.f32 %v1647, %v1648
          %v1650 = vrot.slane %v1649, 1
          %v1651 = vmax.f32 %v1649, %v1650
          %v1652 = vld [vmem:[%s14] sm:$0xff]
          %v1653 = vld [vmem:[%s14 + $0x8] sm:$0xff]
          %v1654 = vld [vmem:[%s14 + $0x10] sm:$0xff]
          %v1655 = vld [vmem:[%s14 + $0x18] sm:$0xff]
          %v1656 = vld [vmem:[%s15] sm:$0x1]
          %v1658 = vsel %vm758, %v1651, 0
          %1660 = vmatprep.subr.mxu0 0.0
          %1661 = vmatpush1.msra.mxu0 %v1652
          %1662 = vmatprep.subr.mxu0 0.0
          %1663 = vmatpush1.msra.mxu0 %v1653
          %1664 = vmatprep.subr.mxu0 0.0
          %1665 = vmatpush1.msra.mxu0 %v1654
          %1666 = vmatprep.subr.mxu0 0.0
          %1667 = vmatpush1.msra.mxu0 %v1655
          %1668 = vmatprep.subr.mxu0 0.0
          %1669 = vmatpush1.msra.mxu0 0.0
          %1670 = vmatprep.subr.mxu0 0.0
          %1671 = vmatpush1.msra.mxu0 0.0
          %1672 = vmatprep.subr.mxu0 0.0
          %1673 = vmatpush1.msra.mxu0 0.0
          %1674 = vmatprep.subr.mxu0 0.0
          %1675 = vmatpush1.msra.mxu0 0.0
          %1676 = vmatprep.subr.mxu0 0.0
          %1677 = vmatpush1.msra.mxu0 0.0
          %1678 = vmatprep.subr.mxu0 0.0
          %1679 = vmatpush1.msra.mxu0 0.0
          %1680 = vmatprep.subr.mxu0 0.0
          %1681 = vmatpush1.msra.mxu0 0.0
          %1682 = vmatprep.subr.mxu0 0.0
          %1683 = vmatpush1.msra.mxu0 0.0
          %1684 = vmatprep.subr.mxu0 0.0
          %1685 = vmatpush1.msra.mxu0 0.0
          %1686 = vmatprep.subr.mxu0 0.0
          %1687 = vmatpush1.msra.mxu0 0.0
          %1688 = vmatprep.subr.mxu0 0.0
          %1689 = vmatpush1.msra.mxu0 0.0
          %1690 = vmatprep.subr.mxu0 0.0
          %1691 = vmatpush1.msra.mxu0 0.0
          %1692 = vmatprep.subr.mxu0 0.0
          %1693 = vmatpush1.msra.mxu0 0.0
          %1694 = vmatprep.subr.mxu0 0.0
          %1695 = vmatpush1.msra.mxu0 0.0
          %1696 = vmatprep.subr.mxu0 0.0
          %1697 = vmatpush1.msra.mxu0 0.0
          %1698 = vmatprep.subr.mxu0 0.0
          %1699 = vmatpush1.msra.mxu0 0.0
          %1700 = vmatprep.subr.mxu0 0.0
          %1701 = vmatpush1.msra.mxu0 0.0
          %1702 = vmatprep.subr.mxu0 0.0
          %1703 = vmatpush1.msra.mxu0 0.0
          %1704 = vmatprep.subr.mxu0 0.0
          %1705 = vmatpush1.msra.mxu0 0.0
          %1706 = vmatprep.subr.mxu0 0.0
          %1707 = vmatpush1.msra.mxu0 0.0
          %1708 = vmatprep.subr.mxu0 0.0
          %1709 = vmatpush1.msra.mxu0 0.0
          %1710 = vmatprep.subr.mxu0 0.0
          %1711 = vmatpush1.msra.mxu0 0.0
          %1712 = vmatprep.subr.mxu0 0.0
          %1713 = vmatpush1.msra.mxu0 0.0
          %1714 = vmatprep.subr.mxu0 0.0
          %1715 = vmatpush1.msra.mxu0 0.0
          %1716 = vmatprep.subr.mxu0 0.0
          %1717 = vmatpush1.msra.mxu0 0.0
          %1718 = vmatprep.subr.mxu0 0.0
          %1719 = vmatpush1.msra.mxu0 0.0
          %1720 = vmatprep.subr.mxu0 0.0
          %1721 = vmatpush1.msra.mxu0 0.0
          %1722 = vmatprep.subr.mxu0 0.0
          %1723 = vmatpush1.msra.mxu0 0.0
          %1724 = vmatprep.mubr.f32.mxu0 0.0
          %1725 = vmatmul.mubr.f32.gmra.mrb[0].mxu0 %v1658
          %v1726 = vpop.f32.mrb[0].mxu0
          %v1727 = vadd.f32 %v1656, %v1726
          %v1728 = vpop.f32.mrb[0].mxu0
          %1729 = vdwg.mxu0
          %v1730 = vlaneseq
          %v1731 = vand.u32 %v1730, 127
          %vm1732 = vcmp.lt.s32.totalorder %v1731, 4
          %v1733 = vsel %vm1732, %v1727, -inf
          %vm1734 = vcmask 1040384
          %v1735 = vsel %vm1734, %v1733, -inf
          %1736 = vmax.xlane.f32.xlu0 %v1735
          %v1737 = vpop.xlane.xlu0 %1736
          %v1738 = vsub.f32 %v1733, %v1737
          %v1739 = vmul.f32 %v1738, 1.442695
          %v1740 = vpow.pop %v1739
          %v1741 = vsel %vm1734, %v1740, 0.0
          %1742 = vadd.xlane.f32.xlu0 %v1741
          %v1743 = vpop.xlane.xlu0 %1742
          %v1744 = vlog2.pop %v1743
          %v1745 = vmul.f32 %v1744, 0.6931472
          %v1746 = vsub.f32 %v1738, %v1745
          %1747 = vst [vmem:[%s690] sm:$0x1] %v1746
        $region92: #{tpu_custom_call.1} parent=83 // pred_fallthru
          _
        %s1748 = sand.u32 %s456, 1
        %s1749 = scalar_lea.sflag [#allocation4], %s1748
        %s1750 = sand.u32 %s456, 1
        %s1751 = scalar_lea.vmem [#allocation3], %s1750
        // Predicated region
        $region93: #{tpu_custom_call.1} parent=83 // pred_check
          %p1752 = pneg %p466
        $region94: #{tpu_custom_call.1} parent=83 // pred_check_branch
          %1754 = sbr.rel (%p1752) target = $region96
        $region95: #{tpu_custom_call.1} parent=83 // pred_region
          %s1756 = ssub.s32 16, 16
          %1757 = vsyncadd %s1749, %s1756
          %s1758 = smul.addr %s34, 16
          %s1759 = scalar_lea.hbm %s16, %s1758
          %s1761 = sshll.u32 %s1751, 4
          %s1762 = int_to_ptr.vmem [resolvable:$true] %s1761
          %1764 = dma.vmem_to_hbm [thread:$0]  %s1762, 16, %s1759, %s1749
        $region96: #{tpu_custom_call.1} parent=83 // pred_fallthru
          _
      $region84: #{tpu_custom_call.1} parent=5 // pred_fallthru
        _
      %p1765 = scmp.le.s32.totalorder 2, %s25
      // Predicated region
      $region97: #{tpu_custom_call.1} parent=5 // pred_check
        %p1766 = pneg %p1765
      $region98: #{tpu_custom_call.1} parent=5 // pred_check_branch
        %1768 = sbr.rel (%p1766) target = $region100
      $region99: #{tpu_custom_call.1} parent=5 // pred_region
        %s1769 = ssub.s32 %s25, 2
        // Predicated region
        $region101: #{tpu_custom_call.1} parent=99 // pred_check
          %p1770 = pneg %p472
        $region102: #{tpu_custom_call.1} parent=99 // pred_check_branch
          %1772 = sbr.rel (%p1770) target = $region104
        $region103: #{tpu_custom_call.1} parent=99 // pred_region
          %s1773 = sand.u32 %s457, 1
          %s1774 = scalar_lea.sflag [#allocation4], %s1773
          %s1775 = sand.u32 %s457, 1
          %s1776 = scalar_lea.vmem [#allocation3], %s1775
          %1777 = dma.done %s1774, 16
        $region104: #{tpu_custom_call.1} parent=99 // pred_fallthru
          _
      $region100: #{tpu_custom_call.1} parent=5 // pred_fallthru
        _
    $region6: #{tpu_custom_call.1} parent=1 // loop_footer
      %s29 = sadd.s32 1, %s25
    $region7: #{tpu_custom_call.1} parent=1 // loop_footer_branch
      %24 = sbr.rel target = $region3
    $region8: #{tpu_custom_call.1} parent=1 // loop_exit
      _
    %1778 = vsyncpa [#allocation4], 1
    %s1779 = scalar_lea.sflag [#allocation4], 1
    %1780 = vsyncpa %s1779, 1

</llo_original>
